<compile_context>
chip_gen: v6e
topology: v6e:2x2x1
jax: 0.10.0
libtpu: 0.0.40
codegen_flags: <defaults>
</compile_context>

<pallas_src>
import math
from functools import partial

import numpy as np
import jax
import jax.numpy as jnp
from jax.experimental import pallas as pl
from jax.experimental.pallas import tpu as pltpu

# ----------------------------- scaled-down config ----------------------------
BATCH = 2
IMG_H, IMG_W = 64, 64              # original 480x640
DIM = 32                           # original 512
HEADS = 4                          # original 8
WS = 2                             # swin window size (original 10)
FH, FW = IMG_H // 16, IMG_W // 16  # transformer feature resolution (original (30, 40))
MLP_RATIO = 4
MAX_TILE_M = 512                   # row tile for matmul/LN kernels
MIN_ATTN_ROWS = 256                # target rows (Gb*L) per attention grid step
VMEM_LIMIT = 32 * 1024 * 1024      # v7x-safe scoped VMEM cap


def _round_up(v, m):
    return ((v + m - 1) // m) * m


def _pick_tiles(M):
    """Row tile + padded rows; prefer >=2 grid steps so both v7x TensorCores get work."""
    Mp = _round_up(M, 8)
    tm = min(MAX_TILE_M, Mp)
    if Mp // tm < 2 and Mp >= 16:
        tm = _round_up(Mp // 2, 8)
    Mp = _round_up(Mp, tm)
    return tm, Mp


def _pick_group_block(G, L, period):
    """Smallest multiple of `period` dividing G with >= MIN_ATTN_ROWS rows per step."""
    best = G
    for mult in range(1, G // period + 1):
        gb = period * mult
        if G % gb == 0:
            best = gb
            if gb * L >= MIN_ATTN_ROWS:
                break
    return best


# =============================== Pallas kernels ===============================
def _apply_act(x, act):
    if act == "silu":
        # sigmoid denominator via the EUP approx reciprocal (separate VLIW slot)
        return x * pl.reciprocal(1.0 + jnp.exp(-x), approx=True)
    if act == "gelu":
        # TODO(synk): PyTorch nn.GELU default is exact erf GELU; tanh approximation used here.
        return jax.nn.gelu(x, approximate=True)
    return x


def _mm_kernel(x_ref, w_ref, b_ref, o_ref, *, act):
    acc = jnp.dot(x_ref[...], w_ref[...], preferred_element_type=jnp.float32)
    acc = _apply_act(acc + b_ref[...], act)
    o_ref[...] = acc.astype(o_ref.dtype)


def _mm_res_kernel(x_ref, w_ref, b_ref, r_ref, o_ref, *, act):
    acc = jnp.dot(x_ref[...], w_ref[...], preferred_element_type=jnp.float32)
    acc = _apply_act(acc + b_ref[...], act) + r_ref[...].astype(jnp.float32)
    o_ref[...] = acc.astype(o_ref.dtype)


@partial(jax.jit, static_argnames=("act",))
def matmul_bias_act(x, w, b, act="none", res=None):
    """act(x @ w + b) [+ res].  x:(M,K) bf16, w:(K,N) bf16, b:(N,) f32, res:(M,N) bf16|None.
    bf16 MXU operands, f32 accumulation/epilogue, bf16 output."""
    M, K = x.shape
    N = w.shape[1]
    tm, Mp = _pick_tiles(M)
    xb = x if x.dtype == jnp.bfloat16 else x.astype(jnp.bfloat16)
    if Mp != M:
        xb = jnp.pad(xb, ((0, Mp - M), (0, 0)))
    ins = [xb, w, b.reshape(1, N)]
    in_specs = [pl.BlockSpec((tm, K), lambda i: (i, 0)),
                pl.BlockSpec((K, N), lambda i: (0, 0)),
                pl.BlockSpec((1, N), lambda i: (0, 0))]
    if res is None:
        kernel = partial(_mm_kernel, act=act)
    else:
        r = res if res.dtype == jnp.bfloat16 else res.astype(jnp.bfloat16)
        if Mp != M:
            r = jnp.pad(r, ((0, Mp - M), (0, 0)))
        ins.append(r)
        in_specs.append(pl.BlockSpec((tm, N), lambda i: (i, 0)))
        kernel = partial(_mm_res_kernel, act=act)
    out = pl.pallas_call(
        kernel,
        out_shape=jax.ShapeDtypeStruct((Mp, N), jnp.bfloat16),
        grid_spec=pltpu.PrefetchScalarGridSpec(
            num_scalar_prefetch=0, grid=(Mp // tm,),
            in_specs=in_specs,
            out_specs=pl.BlockSpec((tm, N), lambda i: (i, 0))),
        compiler_params=pltpu.CompilerParams(
            dimension_semantics=("parallel",), vmem_limit_bytes=VMEM_LIMIT),
    )(*ins)
    return out[:M] if Mp != M else out


def _ln_mm_kernel(x_ref, g_ref, bl_ref, w_ref, b_ref, o_ref, *, act, eps):
    # LayerNorm (f32) fused with the consuming matmul (bf16 MXU operands).
    x = x_ref[...].astype(jnp.float32)
    mu = jnp.mean(x, axis=-1, keepdims=True)
    xc = x - mu
    var = jnp.mean(xc * xc, axis=-1, keepdims=True)
    xn = xc * jax.lax.rsqrt(var + eps) * g_ref[...] + bl_ref[...]
    acc = jnp.dot(xn.astype(jnp.bfloat16), w_ref[...], preferred_element_type=jnp.float32)
    acc = _apply_act(acc + b_ref[...], act)
    o_ref[...] = acc.astype(o_ref.dtype)


@partial(jax.jit, static_argnames=("act", "eps"))
def ln_matmul_bias_act(x, g, bl, w, b, act="none", eps=1e-5):
    """act(LayerNorm(x) @ w + b) fused in one kernel.  x bf16, g/bl/b f32, w bf16, out bf16."""
    M, C = x.shape
    N = w.shape[1]
    tm, Mp = _pick_tiles(M)
    xb = x if x.dtype == jnp.bfloat16 else x.astype(jnp.bfloat16)
    if Mp != M:
        xb = jnp.pad(xb, ((0, Mp - M), (0, 0)))
    out = pl.pallas_call(
        partial(_ln_mm_kernel, act=act, eps=eps),
        out_shape=jax.ShapeDtypeStruct((Mp, N), jnp.bfloat16),
        grid_spec=pltpu.PrefetchScalarGridSpec(
            num_scalar_prefetch=0, grid=(Mp // tm,),
            in_specs=[pl.BlockSpec((tm, C), lambda i: (i, 0)),
                      pl.BlockSpec((1, C), lambda i: (0, 0)),
                      pl.BlockSpec((1, C), lambda i: (0, 0)),
                      pl.BlockSpec((C, N), lambda i: (0, 0)),
                      pl.BlockSpec((1, N), lambda i: (0, 0))],
            out_specs=pl.BlockSpec((tm, N), lambda i: (i, 0))),
        compiler_params=pltpu.CompilerParams(
            dimension_semantics=("parallel",), vmem_limit_bytes=VMEM_LIMIT),
    )(xb, g.reshape(1, C), bl.reshape(1, C), w, b.reshape(1, N))
    return out[:M] if Mp != M else out


# ----------------------------- window attention -------------------------------
def _wattn_bias_kernel(qkv_ref, bias_ref, o_ref, *, heads, scale):
    """qkv_ref: (Gb, L, 3C) bf16, bias_ref: (nW, heads, L, L) f32, o_ref: (Gb, L, C) bf16.
    Gb consecutive windows per step; block start is a multiple of nW, so window j in the
    block uses bias[j % nW]."""
    Gb, L, C3 = qkv_ref.shape
    C = C3 // 3
    dh = C // heads
    nW = bias_ref.shape[0]
    for h in range(heads):
        q = qkv_ref[:, :, h * dh:(h + 1) * dh]
        k = qkv_ref[:, :, C + h * dh:C + (h + 1) * dh]
        v = qkv_ref[:, :, 2 * C + h * dh:2 * C + (h + 1) * dh]
        s = jnp.einsum('gld,gmd->glm', q, k, preferred_element_type=jnp.float32) * scale
        b = bias_ref[:, h]                       # (nW, L, L)
        if Gb != nW:
            b = jnp.tile(b, (Gb // nW, 1, 1))
        s = s + b
        s = s - jnp.max(s, axis=-1, keepdims=True)
        p = jnp.exp(s)
        p = p * pl.reciprocal(jnp.sum(p, axis=-1, keepdims=True), approx=True)
        o = jnp.einsum('glm,gmd->gld', p.astype(q.dtype), v,
                       preferred_element_type=jnp.float32)
        o_ref[:, :, h * dh:(h + 1) * dh] = o.astype(o_ref.dtype)


def _xattn_kernel(q_ref, kv_ref, o_ref, *, heads, scale):
    """Bias-free cross attention.  q_ref: (Gb, L, C), kv_ref: (Gb, L, 2C), out (Gb, L, C)."""
    Gb, L, C = q_ref.shape
    dh = C // heads
    for h in range(heads):
        q = q_ref[:, :, h * dh:(h + 1) * dh]
        k = kv_ref[:, :, h * dh:(h + 1) * dh]
        v = kv_ref[:, :, C + h * dh:C + (h + 1) * dh]
        s = jnp.einsum('gld,gmd->glm', q, k, preferred_element_type=jnp.float32) * scale
        s = s - jnp.max(s, axis=-1, keepdims=True)
        p = jnp.exp(s)
        p = p * pl.reciprocal(jnp.sum(p, axis=-1, keepdims=True), approx=True)
        o = jnp.einsum('glm,gmd->gld', p.astype(q.dtype), v,
                       preferred_element_type=jnp.float32)
        o_ref[:, :, h * dh:(h + 1) * dh] = o.astype(o_ref.dtype)


@partial(jax.jit, static_argnames=("heads", "scale"))
def window_attention_bias(qkv, bias, heads, scale):
    """qkv: (G, L, 3C) bf16 packed; bias: (nW, heads, L, L) f32 shared with period nW."""
    G, L, C3 = qkv.shape
    C = C3 // 3
    nW = bias.shape[0]
    Gb = _pick_group_block(G, L, nW)
    return pl.pallas_call(
        partial(_wattn_bias_kernel, heads=heads, scale=scale),
        out_shape=jax.ShapeDtypeStruct((G, L, C), jnp.bfloat16),
        grid_spec=pltpu.PrefetchScalarGridSpec(
            num_scalar_prefetch=0, grid=(G // Gb,),
            in_specs=[pl.BlockSpec((Gb, L, C3), lambda g: (g, 0, 0)),
                      pl.BlockSpec((nW, heads, L, L), lambda g: (0, 0, 0, 0))],
            out_specs=pl.BlockSpec((Gb, L, C), lambda g: (g, 0, 0))),
        compiler_params=pltpu.CompilerParams(
            dimension_semantics=("parallel",), vmem_limit_bytes=VMEM_LIMIT),
    )(qkv, bias)


@partial(jax.jit, static_argnames=("heads", "scale"))
def cross_attention(q, kv, heads, scale):
    """q: (G, L, C) bf16, kv: (G, L, 2C) bf16 packed k|v, bias-free."""
    G, L, C = q.shape
    Gb = _pick_group_block(G, L, 1)
    return pl.pallas_call(
        partial(_xattn_kernel, heads=heads, scale=scale),
        out_shape=jax.ShapeDtypeStruct((G, L, C), jnp.bfloat16),
        grid_spec=pltpu.PrefetchScalarGridSpec(
            num_scalar_prefetch=0, grid=(G // Gb,),
            in_specs=[pl.BlockSpec((Gb, L, C), lambda g: (g, 0, 0)),
                      pl.BlockSpec((Gb, L, 2 * C), lambda g: (g, 0, 0))],
            out_specs=pl.BlockSpec((Gb, L, C), lambda g: (g, 0, 0))),
        compiler_params=pltpu.CompilerParams(
            dimension_semantics=("parallel",), vmem_limit_bytes=VMEM_LIMIT),
    )(q, kv)


# ============================ parameter factory ===============================
class ParamFactory:
    def __init__(self, seed=42):
        self.key = jax.random.PRNGKey(seed)

    def normal(self, shape, scale=0.02):
        self.key, sub = jax.random.split(self.key)
        return jax.random.normal(sub, shape, jnp.float32) * scale


# ============================ conv building blocks ============================
def im2col_nhwc(x, kh, kw, stride, pad):
    """x: (B, H, W, C) bf16 NHWC -> (B*Ho*Wo, kh*kw*C) patches (kh, kw, C ordering)."""
    # TODO(synk): patch gather still done in XLA; in-kernel halo-DMA im2col is future work.
    B, H, W, C = x.shape
    if pad > 0:
        x = jnp.pad(x, ((0, 0), (pad, pad), (pad, pad), (0, 0)))
    Ho = (H + 2 * pad - kh) // stride + 1
    Wo = (W + 2 * pad - kw) // stride + 1
    cols = []
    for i in range(kh):
        for j in range(kw):
            cols.append(x[:, i:i + stride * Ho:stride, j:j + stride * Wo:stride, :])
    patches = jnp.concatenate(cols, axis=-1)                 # (B, Ho, Wo, kh*kw*C)
    return patches.reshape(B * Ho * Wo, kh * kw * C), Ho, Wo


def make_conv(pf, cin, cout, k, s=1, p=None):
    # TODO(synk): `Conv` class not provided; assumed Ultralytics Conv = Conv2d(bias=False)+BN+SiLU.
    if p is None:
        p = k // 2
    w = pf.normal((cout, cin, k, k), 1.0 / math.sqrt(cin * k * k))
    bn_g = jnp.ones((cout,), jnp.float32)
    bn_b = jnp.zeros((cout,), jnp.float32)
    bn_m = jnp.zeros((cout,), jnp.float32)
    bn_v = jnp.ones((cout,), jnp.float32)
    inv = bn_g * jax.lax.rsqrt(bn_v + 1e-5)
    w_f = w * inv[:, None, None, None]
    b_f = bn_b - bn_m * inv
    # Fold BN + reshape to matmul layout (kh, kw, cin)->cout once, pre-cast to bf16.
    w_mat = w_f.transpose(2, 3, 1, 0).reshape(k * k * cin, cout).astype(jnp.bfloat16)
    return {"w": w_mat, "b": b_f.astype(jnp.float32),
            "k": k, "s": s, "p": p, "cout": cout}


def conv_block(x, p, act="silu", res=None):
    """Conv2d(no bias)+folded BN(eval)+SiLU on NHWC bf16 input; 1x1 convs skip im2col."""
    B = x.shape[0]
    k, s, pad = p["k"], p["s"], p["p"]
    if k == 1 and s == 1:
        H, W = x.shape[1], x.shape[2]
        cols, Ho, Wo = x.reshape(-1, x.shape[-1]), H, W
    else:
        cols, Ho, Wo = im2col_nhwc(x, k, k, s, pad)
    y = matmul_bias_act(cols, p["w"], p["b"], act=act, res=res)
    return y.reshape(B, Ho, Wo, p["cout"])


# ------------------------------ YOLO C3k2 stack -------------------------------
# TODO(synk): C3k2 / C3k / Bottleneck not provided; follows Ultralytics YOLO11 definitions.
def make_bottleneck(pf, c1, c2, shortcut=True, k=(3, 3), e=1.0):
    c_ = int(c2 * e)
    return {"cv1": make_conv(pf, c1, c_, k[0]),
            "cv2": make_conv(pf, c_, c2, k[1]),
            "add": bool(shortcut and c1 == c2)}


def bottleneck_fwd(x, p):
    y = conv_block(x, p["cv1"])
    # residual fused into cv2's matmul epilogue when the shortcut applies
    res = x.reshape(-1, x.shape[-1]) if p["add"] else None
    return conv_block(y, p["cv2"], res=res)


def make_c3k(pf, c1, c2, n=2, e=0.5, k=3):
    c_ = int(c2 * e)
    cv1 = make_conv(pf, c1, c_, 1)
    cv2 = make_conv(pf, c1, c_, 1)
    # cv1 and cv2 are 1x1 convs on the same input -> fuse into one lane-denser matmul.
    return {"c_": c_,
            "cv12_w": jnp.concatenate([cv1["w"], cv2["w"]], axis=1),
            "cv12_b": jnp.concatenate([cv1["b"], cv2["b"]]),
            "cv3": make_conv(pf, 2 * c_, c2, 1),
            "m": [make_bottleneck(pf, c_, c_, True, (k, k), 1.0) for _ in range(n)]}


def c3k_fwd(x, p):
    B, H, W, Cin = x.shape
    c_ = p["c_"]
    y = matmul_bias_act(x.reshape(-1, Cin), p["cv12_w"], p["cv12_b"], act="silu")
    y = y.reshape(B, H, W, 2 * c_)
    y1, y2 = y[..., :c_], y[..., c_:]
    for bp in p["m"]:
        y1 = bottleneck_fwd(y1, bp)
    return conv_block(jnp.concatenate([y1, y2], axis=-1), p["cv3"])


def make_c3k2(pf, c1, c2, n=1, c3k=True, e=0.5):
    c = int(c2 * e)
    return {"c": c,
            "cv1": make_conv(pf, c1, 2 * c, 1),
            "cv2": make_conv(pf, (2 + n) * c, c2, 1),
            "m": [make_c3k(pf, c, c, 2) for _ in range(n)]}


def c3k2_fwd(x, p):
    y = conv_block(x, p["cv1"])
    c = p["c"]
    ys = [y[..., :c], y[..., c:]]
    for mp in p["m"]:
        ys.append(c3k_fwd(ys[-1], mp))
    return conv_block(jnp.concatenate(ys, axis=-1), p["cv2"])


# ----------------------------- Swin transformer -------------------------------
def _rel_pos_index(ws):
    coords = np.stack(np.meshgrid(np.arange(ws), np.arange(ws), indexing="ij"))
    cf = coords.reshape(2, -1)
    rel = (cf[:, :, None] - cf[:, None, :]).transpose(1, 2, 0).astype(np.int64)
    rel[:, :, 0] += ws - 1
    rel[:, :, 1] += ws - 1
    rel[:, :, 0] *= 2 * ws - 1
    return rel.sum(-1)                                      # (L, L)


def _shift_mask(H, W, ws, shift):
    img = np.zeros((H, W))
    cnt = 0
    for hs in (slice(0, -ws), slice(-ws, -shift), slice(-shift, None)):
        for wss in (slice(0, -ws), slice(-ws, -shift), slice(-shift, None)):
            img[hs, wss] = cnt
            cnt += 1
    mw = img.reshape(H // ws, ws, W // ws, ws).transpose(0, 2, 1, 3).reshape(-1, ws * ws)
    am = mw[:, None, :] - mw[:, :, None]
    return jnp.asarray(np.where(am != 0, -100.0, 0.0).astype(np.float32))   # (nW, L, L)


def make_swin(pf, dim, res, heads, ws, shift):
    # TODO(synk): SwinTransformerBlock not provided; standard Swin (W-MSA/SW-MSA + MLP,
    # relative-position bias; drop/drop_path treated as eval-mode identity).
    L = ws * ws
    s = 1.0 / math.sqrt(dim)
    rpb_table = pf.normal(((2 * ws - 1) ** 2, heads), 0.02)
    rel_idx = _rel_pos_index(ws)
    rpb = rpb_table[rel_idx.reshape(-1)].reshape(L, L, heads).transpose(2, 0, 1)
    if shift > 0:
        mask = _shift_mask(res[0], res[1], ws, shift)                  # (nW, L, L)
        attn_bias = rpb[None, :, :, :] + mask[:, None, :, :]           # (nW, heads, L, L)
    else:
        attn_bias = rpb[None]                                          # (1, heads, L, L)
    bf = jnp.bfloat16
    return {
        "res": res, "ws": ws, "shift": shift, "heads": heads,
        "ln1_g": jnp.ones((dim,), jnp.float32), "ln1_b": jnp.zeros((dim,), jnp.float32),
        "qkv_w": pf.normal((dim, 3 * dim), s).astype(bf),
        "qkv_b": jnp.zeros((3 * dim,), jnp.float32),
        "proj_w": pf.normal((dim, dim), s).astype(bf),
        "proj_b": jnp.zeros((dim,), jnp.float32),
        "attn_bias": attn_bias.astype(jnp.float32),
        "ln2_g": jnp.ones((dim,), jnp.float32), "ln2_b": jnp.zeros((dim,), jnp.float32),
        "fc1_w": pf.normal((dim, MLP_RATIO * dim), s).astype(bf),
        "fc1_b": jnp.zeros((MLP_RATIO * dim,), jnp.float32),
        "fc2_w": pf.normal((MLP_RATIO * dim, dim), 1.0 / math.sqrt(MLP_RATIO * dim)).astype(bf),
        "fc2_b": jnp.zeros((dim,), jnp.float32),
    }


def swin_fwd(x, p):
    """x: (B, Ltok, C) bf16 tokens."""
    B, Ltok, C = x.shape
    H, W = p["res"]
    ws, shift, heads = p["ws"], p["shift"], p["heads"]
    dh = C // heads
    nW = (H // ws) * (W // ws)
    Lw = ws * ws

    shortcut = x.reshape(-1, C)
    # LN1 fused with the packed qkv projection (per-token ops commute with roll/window split)
    qkv = ln_matmul_bias_act(shortcut, p["ln1_g"], p["ln1_b"], p["qkv_w"], p["qkv_b"])
    qkv = qkv.reshape(B, H, W, 3 * C)
    if shift > 0:
        qkv = jnp.roll(qkv, shift=(-shift, -shift), axis=(1, 2))
    qkv = qkv.reshape(B, H // ws, ws, W // ws, ws, 3 * C).transpose(0, 1, 3, 2, 4, 5)
    qkv = qkv.reshape(B * nW, Lw, 3 * C)                  # packed q|k|v, window index fastest

    o = window_attention_bias(qkv, p["attn_bias"], heads=heads, scale=float(dh) ** -0.5)

    xo = o.reshape(B, H // ws, W // ws, ws, ws, C).transpose(0, 1, 3, 2, 4, 5).reshape(B, H, W, C)
    if shift > 0:
        xo = jnp.roll(xo, shift=(shift, shift), axis=(1, 2))
    # output projection with the residual add fused into the matmul epilogue
    x = matmul_bias_act(xo.reshape(-1, C), p["proj_w"], p["proj_b"], res=shortcut)

    # MLP: LN2 fused with fc1 (GELU), residual fused into fc2 epilogue
    y = ln_matmul_bias_act(x, p["ln2_g"], p["ln2_b"], p["fc1_w"], p["fc1_b"], act="gelu")
    x = matmul_bias_act(y, p["fc2_w"], p["fc2_b"], res=x)
    return x.reshape(B, Ltok, C)


# --------------------------- disparity cross attention ------------------------
def make_disp(pf, heads, dim, width):
    # TODO(synk): DispAttentionBlock not provided; assumed per-row multi-head cross attention
    # (left=query, right=key/value) along width with a learned x-pos embedding + residual.
    s = 1.0 / math.sqrt(dim)
    bf = jnp.bfloat16
    return {"heads": heads,
            "pos": pf.normal((width, dim), 0.02).astype(bf),
            "lnq_g": jnp.ones((dim,), jnp.float32), "lnq_b": jnp.zeros((dim,), jnp.float32),
            "lnk_g": jnp.ones((dim,), jnp.float32), "lnk_b": jnp.zeros((dim,), jnp.float32),
            "wq": pf.normal((dim, dim), s).astype(bf), "bq": jnp.zeros((dim,), jnp.float32),
            "wkv": pf.normal((dim, 2 * dim), s).astype(bf),
            "bkv": jnp.zeros((2 * dim,), jnp.float32),
            "wo": pf.normal((dim, dim), s).astype(bf), "bo": jnp.zeros((dim,), jnp.float32)}


def disp_attention_fwd(left, right, p):
    """left/right: (B, H, W, C) NHWC bf16."""
    B, H, W, C = left.shape
    heads = p["heads"]
    dh = C // heads
    pos = p["pos"][None, None]
    # LN fused with projections; k/v projections packed into one (C, 2C) matmul.
    q = ln_matmul_bias_act((left + pos).reshape(-1, C), p["lnq_g"], p["lnq_b"],
                           p["wq"], p["bq"])
    kv = ln_matmul_bias_act((right + pos).reshape(-1, C), p["lnk_g"], p["lnk_b"],
                            p["wkv"], p["bkv"])
    q = q.reshape(B * H, W, C)
    kv = kv.reshape(B * H, W, 2 * C)
    o = cross_attention(q, kv, heads=heads, scale=float(dh) ** -0.5)
    # output projection with the residual (left stream) fused into the epilogue
    out = matmul_bias_act(o.reshape(-1, C), p["wo"], p["bo"], res=left.reshape(-1, C))
    return out.reshape(B, H, W, C)


# ------------------------------- upsample block --------------------------------
def make_upsample(pf, c1, c2):
    # TODO(synk): UpsampleBlock not provided; assumed nearest 2x upsample + Conv3x3+BN+SiLU.
    return {"conv": make_conv(pf, c1, c2, 3, 1, 1)}


def upsample_fwd(x, p):
    # TODO(synk): fold the nearest 2x upsample into the conv's patch gather to skip the 4x round trip.
    x = jnp.repeat(jnp.repeat(x, 2, axis=1), 2, axis=2)
    return conv_block(x, p["conv"])


# ================================ full model ==================================
def make_encoder(pf):
    return {
        "model": [make_conv(pf, 3, 4, 3, 2, 1),
                  make_conv(pf, 4, 8, 3, 2, 1),
                  make_c3k2(pf, 8, 16, c3k=True, e=0.25),
                  make_conv(pf, 16, 16, 3, 2, 1),
                  make_c3k2(pf, 16, 32, c3k=True, e=0.25),
                  make_conv(pf, 32, 32, 3, 2, 1),
                  make_c3k2(pf, 32, 32, c3k=True, e=0.5)],
        "types": ["conv", "conv", "c3k2", "conv", "c3k2", "conv", "c3k2"],
        "swin": [make_swin(pf, DIM, (FH, FW), HEADS, WS, 0),
                 make_swin(pf, DIM, (FH, FW), HEADS, WS, WS // 2),
                 make_swin(pf, DIM, (FH, FW), HEADS, WS, 0),
                 make_swin(pf, DIM, (FH, FW), HEADS, WS, WS // 2)],
    }


def encoder_fwd(x, p):
    """x: (B, H, W, 3) NHWC bf16.  Returns NHWC feature + NHWC high-res skip."""
    feats = [x]
    for typ, mp in zip(p["types"], p["model"]):
        feats.append(conv_block(feats[-1], mp) if typ == "conv" else c3k2_fwd(feats[-1], mp))
    x = feats[-1]
    B, H, W, C = x.shape
    x = x.reshape(B, H * W, C)                       # already channel-last: no transpose needed
    for sp in p["swin"]:
        x = swin_fwd(x, sp)
    return x.reshape(B, H, W, C), feats[-4]


def make_decoder(pf):
    out_w = pf.normal((2, 2, 1, 1), 1.0 / math.sqrt(2)).reshape(2, 2).T.astype(jnp.bfloat16)
    return {
        "disp": make_disp(pf, HEADS, DIM, FW),
        "swin": [make_swin(pf, DIM, (FH, FW), HEADS, WS, 0),
                 make_swin(pf, DIM, (FH, FW), HEADS, WS, WS // 2),
                 make_swin(pf, DIM, (FH, FW), HEADS, WS, 0),
                 make_swin(pf, DIM, (FH, FW), HEADS, WS, WS // 2)],
        "up": [make_upsample(pf, 32, 16),
               make_upsample(pf, 32, 8),
               make_upsample(pf, 8, 4),
               make_upsample(pf, 4, 2)],
        "out_w": out_w,
        "out_b": jnp.zeros((2,), jnp.float32),
    }


def decoder_fwd(left, left_high_res, right, p):
    """left/left_high_res/right are NHWC bf16."""
    B, H, W, C = left.shape
    out = disp_attention_fwd(left, right, p["disp"]).reshape(B, H * W, C)
    for sp in p["swin"]:
        out = swin_fwd(out, sp)
    out = out.reshape(B, H, W, C)
    out = upsample_fwd(out, p["up"][0])
    out = jnp.concatenate([out, left_high_res], axis=-1)
    for up in p["up"][1:]:
        out = upsample_fwd(out, up)
    # out_lay: 1x1 conv with bias as a Pallas matmul over tokens (N=2 is inherently narrow).
    Bn, Hh, Ww, Cc = out.shape
    y = matmul_bias_act(out.reshape(-1, Cc), p["out_w"], p["out_b"], act="none")
    # back to NCHW only at the very end to match the PyTorch module output layout
    return y.reshape(Bn, Hh, Ww, 2).transpose(0, 3, 1, 2).astype(jnp.float32)


def make_model_params(pf):
    return {"enc": make_encoder(pf), "dec": make_decoder(pf)}


def model_disp_fwd(left_img, right_img, params):
    """left/right: (B, 3, H, W) NCHW f32 (PyTorch layout); converted once to NHWC bf16."""
    l = jnp.transpose(left_img, (0, 2, 3, 1)).astype(jnp.bfloat16)
    r = jnp.transpose(right_img, (0, 2, 3, 1)).astype(jnp.bfloat16)
    l_feat, l_high = encoder_fwd(l, params["enc"])
    r_feat, _ = encoder_fwd(r, params["enc"])
    return decoder_fwd(l_feat, l_high, r_feat, params["dec"])


# =================================== main =====================================
if __name__ == "__main__":
    params = make_model_params(ParamFactory(seed=42))

    key = jax.random.PRNGKey(0)
    kl, kr = jax.random.split(key)
    left = jax.random.normal(kl, (BATCH, 3, IMG_H, IMG_W), jnp.float32)
    right = jax.random.normal(kr, (BATCH, 3, IMG_H, IMG_W), jnp.float32)

    out = model_disp_fwd(left, right, params)
    out = jax.block_until_ready(out)

    assert out.shape == (BATCH, 2, IMG_H, IMG_W), out.shape
    assert bool(jnp.all(jnp.isfinite(out)))
    print("KERNEL_OK")
</pallas_src>

<mosaic_0001>
module attributes {stable_mosaic.version = 11 : i64} {
  func.func @_mm_kernel(%arg0: i32, %arg1: memref<512x27xbf16, #tpu.memory_space<vmem>>, %arg2: memref<27x4xbf16, #tpu.memory_space<vmem>>, %arg3: memref<1x4xf32, #tpu.memory_space<vmem>>, %arg4: memref<512x4xbf16, #tpu.memory_space<vmem>>) attributes {dimension_semantics = [#tpu.dimension_semantics<parallel>], iteration_bounds = array<i64: 4>, scalar_prefetch = 0 : i64, scratch_operands = 0 : i64, tpu.core_type = #tpu.core_type<tc>, window_params = [{transform_indices = @transform_0, window_bounds = array<i64: 512, 27>}, {pipeline_mode = #tpu.pipeline_mode<synchronous>, transform_indices = @transform_1, window_bounds = array<i64: 27, 4>}, {pipeline_mode = #tpu.pipeline_mode<synchronous>, transform_indices = @transform_2, window_bounds = array<i64: 1, 4>}, {transform_indices = @transform_3, window_bounds = array<i64: 512, 4>}]} {
    %c0 = arith.constant 0 : index
    %c0_0 = arith.constant 0 : index
    %0 = vector.load %arg1[%c0, %c0_0] : memref<512x27xbf16, #tpu.memory_space<vmem>>, vector<512x27xbf16>
    %c0_1 = arith.constant 0 : index
    %c0_2 = arith.constant 0 : index
    %1 = vector.load %arg2[%c0_1, %c0_2] : memref<27x4xbf16, #tpu.memory_space<vmem>>, vector<27x4xbf16>
    %cst = arith.constant dense<0.000000e+00> : vector<512x4xf32>
    %2 = tpu.matmul %0, %1, %cst {dimension_numbers = #tpu.dot_dimension_numbers<[1], [0], [0], [1], [0, 0, 1, 1], [], []>} : vector<512x27xbf16>, vector<27x4xbf16>, vector<512x4xf32> -> vector<512x4xf32>
    %c0_3 = arith.constant 0 : index
    %c0_4 = arith.constant 0 : index
    %3 = vector.load %arg3[%c0_3, %c0_4] : memref<1x4xf32, #tpu.memory_space<vmem>>, vector<1x4xf32>
    %4 = vector.broadcast %3 : vector<1x4xf32> to vector<512x4xf32>
    %5 = arith.addf %2, %4 : vector<512x4xf32>
    %cst_5 = arith.constant 0.000000e+00 : f32
    %6 = vector.broadcast %cst_5 : f32 to vector<512x4xf32>
    %7 = arith.subf %6, %5 : vector<512x4xf32>
    %8 = math.exp %7 : vector<512x4xf32>
    %cst_6 = arith.constant 1.000000e+00 : f32
    %9 = vector.broadcast %cst_6 : f32 to vector<512x4xf32>
    %10 = arith.addf %9, %8 : vector<512x4xf32>
    %11 = tpu.reciprocal %10 {approx = true} : vector<512x4xf32> -> vector<512x4xf32>
    %12 = arith.mulf %5, %11 : vector<512x4xf32>
    %13 = arith.truncf %12 : vector<512x4xf32> to vector<512x4xbf16>
    %c0_7 = arith.constant 0 : index
    %c0_8 = arith.constant 0 : index
    %14 = vector.load %arg4[%c0_7, %c0_8] : memref<512x4xbf16, #tpu.memory_space<vmem>>, vector<512x4xbf16>
    tpu.vector_store %arg4[%c0_7, %c0_8], %13 {strides = array<i32>} : memref<512x4xbf16, #tpu.memory_space<vmem>>, vector<512x4xbf16>,
    return
  }
  func.func @transform_0(%arg0: i32) -> (i32, i32) {
    %c0_i32 = arith.constant 0 : i32
    %c0_i32_0 = arith.constant 0 : i32
    return %arg0, %c0_i32 : i32, i32
  }
  func.func @transform_1(%arg0: i32) -> (i32, i32) {
    %c0_i32 = arith.constant 0 : i32
    %c0_i32_0 = arith.constant 0 : i32
    %c0_i32_1 = arith.constant 0 : i32
    return %c0_i32, %c0_i32_0 : i32, i32
  }
  func.func @transform_2(%arg0: i32) -> (i32, i32) {
    %c0_i32 = arith.constant 0 : i32
    %c0_i32_0 = arith.constant 0 : i32
    %c0_i32_1 = arith.constant 0 : i32
    return %c0_i32, %c0_i32_0 : i32, i32
  }
  func.func @transform_3(%arg0: i32) -> (i32, i32) {
    %c0_i32 = arith.constant 0 : i32
    %c0_i32_0 = arith.constant 0 : i32
    return %arg0, %c0_i32 : i32, i32
  }
}

</mosaic_0001>

<llo_original>
// kernel: matmul_bias_act.1
$region0: #{matmul_bias_act.1}
  #allocation0 [shape = 'u32[]', space=smem, size = 0x4, offset = 0x4, fixed_abs, tag = 'smem constant byte address 0x4 - core index']
  #allocation1 [shape = 'u32[144,128]{1,0:T(1,128)}', space=vmem, size = 0x12000, scoped, tag = 'internal scratch']
  %s0 = inlined_call_operand.vmem [shape: bf16[2048,27], index: 0, kind: input, shape index: {}]
  %s1 = inlined_call_operand.vmem [shape: bf16[27,4], index: 1, kind: input, shape index: {}]
  %s2 = inlined_call_operand.vmem [shape: f32[1,4], index: 2, kind: input, shape index: {}]
  %s3 = inlined_call_operand.vmem [shape: bf16[2048,4], index: 3, kind: output, shape index: {}]
  %s4 = sld [smem:[#allocation0]]
  $region45: #{matmul_bias_act.1} parent=0
    _
  %s6 = ssub.s32 1, %s4
  %s7 = scalar_select 0, %s6, %s4
  loop: start=0, step=1, limit=6
  $region2: #{matmul_bias_act.1} parent=0 // loop_pre_header
    _
  $region3: #{matmul_bias_act.1} parent=0 // loop_header
    %s9 = sphi 0, %s13
    %p10 = scmp.ge.s32.totalorder %s9, 6
    %s19 = sphi 0, %s21
    %s22 = sphi 0, %s19
    %s23 = sphi 0, %s22
    %s39 = sphi 0, %s23
    %s43 = sphi 0, %s43
    %s45 = sphi 0, %s43
    %s46 = sphi 0, %s45
    %s60 = sphi 0, %s46
    %s64 = sphi 0, %s64
    %s66 = sphi 0, %s64
    %s67 = sphi 0, %s66
    %s81 = sphi 0, %s67
    %s87 = sphi 0, %s89
    %s90 = sphi 0, %s87
    %s91 = sphi 0, %s90
    %s107 = sphi 0, %s91
  $region4: #{matmul_bias_act.1} parent=0 // loop_header_branch
    %12 = sbr.rel (%p10) target = $region8
  $region5: #{matmul_bias_act.1} parent=0 // loop_body
    %s14 = ssub.s32 %s9, 1
    %s15 = ssub.s32 %s9, 2
    %s16 = sadd.s32 %s9, 1
    %s17 = ssub.s32 %s9, %s16
    %p18 = scmp.eq.s32.totalorder %s17, 0
    %s20 = sadd.s32 %s19, 1
    %s21 = scalar_select %p18, %s19, %s20
    %p24 = pneg %p18
    %p25 = scmp.eq.s32.totalorder %s9, 3
    %p26 = por %p24, %p25
    %p27 = scmp.ne.s32.totalorder %s19, %s22
    %p28 = scmp.eq.s32.totalorder %s9, 0
    %p29 = por %p27, %p28
    %p30 = scmp.ne.s32.totalorder %s19, %s22
    %p31 = scmp.eq.s32.totalorder %s14, 3
    %p32 = por %p30, %p31
    %p33 = scmp.ne.s32.totalorder %s22, %s23
    %p34 = scmp.eq.s32.totalorder %s14, 0
    %p35 = por %p33, %p34
    %p36 = scmp.ne.s32.totalorder %s22, %s23
    %p37 = scmp.eq.s32.totalorder %s15, 3
    %p38 = por %p36, %p37
    %p40 = scmp.ne.s32.totalorder %s23, %s39
    %p41 = scmp.eq.s32.totalorder %s15, 0
    %p42 = por %p40, %p41
    %s44 = sadd.s32 %s43, 1
    %p47 = scmp.eq.s32.totalorder %s9, 3
    %p48 = scmp.ne.s32.totalorder %s43, %s45
    %p49 = scmp.eq.s32.totalorder %s9, 0
    %p50 = por %p48, %p49
    %p51 = scmp.ne.s32.totalorder %s43, %s45
    %p52 = scmp.eq.s32.totalorder %s14, 3
    %p53 = por %p51, %p52
    %p54 = scmp.ne.s32.totalorder %s45, %s46
    %p55 = scmp.eq.s32.totalorder %s14, 0
    %p56 = por %p54, %p55
    %p57 = scmp.ne.s32.totalorder %s45, %s46
    %p58 = scmp.eq.s32.totalorder %s15, 3
    %p59 = por %p57, %p58
    %p61 = scmp.ne.s32.totalorder %s46, %s60
    %p62 = scmp.eq.s32.totalorder %s15, 0
    %p63 = por %p61, %p62
    %s65 = sadd.s32 %s64, 1
    %p68 = scmp.eq.s32.totalorder %s9, 3
    %p69 = scmp.ne.s32.totalorder %s64, %s66
    %p70 = scmp.eq.s32.totalorder %s9, 0
    %p71 = por %p69, %p70
    %p72 = scmp.ne.s32.totalorder %s64, %s66
    %p73 = scmp.eq.s32.totalorder %s14, 3
    %p74 = por %p72, %p73
    %p75 = scmp.ne.s32.totalorder %s66, %s67
    %p76 = scmp.eq.s32.totalorder %s14, 0
    %p77 = por %p75, %p76
    %p78 = scmp.ne.s32.totalorder %s66, %s67
    %p79 = scmp.eq.s32.totalorder %s15, 3
    %p80 = por %p78, %p79
    %p82 = scmp.ne.s32.totalorder %s67, %s81
    %p83 = scmp.eq.s32.totalorder %s15, 0
    %p84 = por %p82, %p83
    %s85 = ssub.s32 %s9, %s16
    %p86 = scmp.eq.s32.totalorder %s85, 0
    %s88 = sadd.s32 %s87, 1
    %s89 = scalar_select %p86, %s87, %s88
    %p92 = pneg %p86
    %p93 = scmp.eq.s32.totalorder %s9, 3
    %p94 = por %p92, %p93
    %p95 = scmp.ne.s32.totalorder %s87, %s90
    %p96 = scmp.eq.s32.totalorder %s9, 0
    %p97 = por %p95, %p96
    %p98 = scmp.ne.s32.totalorder %s87, %s90
    %p99 = scmp.eq.s32.totalorder %s14, 3
    %p100 = por %p98, %p99
    %p101 = scmp.ne.s32.totalorder %s90, %s91
    %p102 = scmp.eq.s32.totalorder %s14, 0
    %p103 = por %p101, %p102
    %p104 = scmp.ne.s32.totalorder %s90, %s91
    %p105 = scmp.eq.s32.totalorder %s15, 3
    %p106 = por %p104, %p105
    %p108 = scmp.ne.s32.totalorder %s91, %s107
    %p109 = scmp.eq.s32.totalorder %s15, 0
    %p110 = por %p108, %p109
    %p111 = scmp.le.s32.totalorder 1, %s9
    %p112 = scmp.lt.s32.totalorder %s9, 5
    %p113 = pnand %p111, %p112
    %p114 = pneg %p113
    // Predicated region
    $region9: #{matmul_bias_act.1} parent=5 // pred_check
      _
    $region10: #{matmul_bias_act.1} parent=5 // pred_check_branch
      %116 = sbr.rel (%p113) target = $region12
    $region11: #{matmul_bias_act.1} parent=5 // pred_region
      %s117 = ssub.s32 %s9, 1
      // Predicated region
      $region13: #{matmul_bias_act.1} parent=11 // pred_check
        %p118 = pneg %p56
      $region14: #{matmul_bias_act.1} parent=11 // pred_check_branch
        %120 = sbr.rel (%p118) target = $region16
      $region15: #{matmul_bias_act.1} parent=11 // pred_region
        _
      $region16: #{matmul_bias_act.1} parent=11 // pred_fallthru
        _
      // Predicated region
      $region17: #{matmul_bias_act.1} parent=11 // pred_check
        %p121 = pneg %p77
      $region18: #{matmul_bias_act.1} parent=11 // pred_check_branch
        %123 = sbr.rel (%p121) target = $region20
      $region19: #{matmul_bias_act.1} parent=11 // pred_region
        _
      $region20: #{matmul_bias_act.1} parent=11 // pred_fallthru
        _
    $region12: #{matmul_bias_act.1} parent=5 // pred_fallthru
      _
    %p124 = scmp.lt.s32.totalorder %s9, 4
    // Predicated region
    $region21: #{matmul_bias_act.1} parent=5 // pred_check
      %p125 = pneg %p124
    $region22: #{matmul_bias_act.1} parent=5 // pred_check_branch
      %127 = sbr.rel (%p125) target = $region24
    $region23: #{matmul_bias_act.1} parent=5 // pred_region
      // Predicated region
      $region25: #{matmul_bias_act.1} parent=23 // pred_check
        %p128 = pneg %p29
      $region26: #{matmul_bias_act.1} parent=23 // pred_check_branch
        %130 = sbr.rel (%p128) target = $region28
      $region27: #{matmul_bias_act.1} parent=23 // pred_region
        %s131 = smul.u32 64, %s9
        %p132 = scmp.lt.s32.totalorder %s131, 255
        %s133 = scalar_select %p132, %s131, 255
        %s134 = smul.addr %s133, 4
        %s135 = scalar_lea.vmem %s0, %s134
        %s136 = smul.u32 64, %s9
      $region28: #{matmul_bias_act.1} parent=23 // pred_fallthru
        _
    $region24: #{matmul_bias_act.1} parent=5 // pred_fallthru
      _
    %p137 = scmp.le.s32.totalorder 1, %s9
    %p138 = scmp.lt.s32.totalorder %s9, 5
    %p139 = pnand %p137, %p138
    %p140 = pneg %p139
    // Predicated region
    $region29: #{matmul_bias_act.1} parent=5 // pred_check
      _
    $region30: #{matmul_bias_act.1} parent=5 // pred_check_branch
      %142 = sbr.rel (%p139) target = $region32
    $region31: #{matmul_bias_act.1} parent=5 // pred_region
      %s143 = ssub.s32 %s9, 1
      %s144 = smul.u32 64, %s14
      %p145 = scmp.lt.s32.totalorder %s144, 255
      %s146 = scalar_select %p145, %s144, 255
      %s147 = smul.addr %s146, 4
      %s148 = scalar_lea.vmem %s0, %s147
      %p149 = pneg %p35
      %p150 = pneg %p32
      %p151 = pneg %p56
      %p152 = pneg %p53
      %p153 = pneg %p77
      %p154 = pneg %p74
      %p155 = pneg %p103
      %p156 = pneg %p100
      %s157 = smul.u32 64, %s14
      %p158 = scmp.lt.s32.totalorder %s157, 255
      %s159 = scalar_select %p158, %s157, 255
      %s160 = smul.addr %s159, 4
      %s161 = scalar_lea.vmem %s3, %s160
      %s162 = smul.u32 64, %s14
      %p163 = scmp.lt.s32.totalorder %s162, 255
      %s164 = scalar_select %p163, %s162, 255
      %s165 = smul.addr %s164, 4
      %s166 = scalar_lea.vmem %s0, %s165
      %s167 = smul.u32 64, %s14
      %s168 = smul.u32 64, %s14
      %p169 = scmp.lt.s32.totalorder %s168, 255
      %s170 = scalar_select %p169, %s168, 255
      %s171 = smul.addr %s170, 4
      %s172 = scalar_lea.vmem %s3, %s171
      %s173 = smul.u32 64, %s14
      %v175 = vld [vmem:[%s166] sm:$0xf]
      %v176 = vld [vmem:[%s166 + $0x4] sm:$0xf]
      %v177 = vld [vmem:[%s166 + $0x8] sm:$0xf]
      %v178 = vld [vmem:[%s166 + $0xc] sm:$0xf]
      %v179 = vld [vmem:[%s166 + $0x10] sm:$0xf]
      %v180 = vld [vmem:[%s166 + $0x14] sm:$0xf]
      %v181 = vld [vmem:[%s166 + $0x18] sm:$0xf]
      %v182 = vld [vmem:[%s166 + $0x1c] sm:$0xf]
      %v183 = vld [vmem:[%s166 + $0x20] sm:$0xf]
      %v184 = vld [vmem:[%s166 + $0x24] sm:$0xf]
      %v185 = vld [vmem:[%s166 + $0x28] sm:$0xf]
      %v186 = vld [vmem:[%s166 + $0x2c] sm:$0xf]
      %v187 = vld [vmem:[%s166 + $0x30] sm:$0xf]
      %v188 = vld [vmem:[%s166 + $0x34] sm:$0xf]
      %v189 = vld [vmem:[%s166 + $0x38] sm:$0xf]
      %v190 = vld [vmem:[%s166 + $0x3c] sm:$0xf]
      %v191 = vld [vmem:[%s166 + $0x40] sm:$0xf]
      %v192 = vld [vmem:[%s166 + $0x44] sm:$0xf]
      %v193 = vld [vmem:[%s166 + $0x48] sm:$0xf]
      %v194 = vld [vmem:[%s166 + $0x4c] sm:$0xf]
      %v195 = vld [vmem:[%s166 + $0x50] sm:$0xf]
      %v196 = vld [vmem:[%s166 + $0x54] sm:$0xf]
      %v197 = vld [vmem:[%s166 + $0x58] sm:$0xf]
      %v198 = vld [vmem:[%s166 + $0x5c] sm:$0xf]
      %v199 = vld [vmem:[%s166 + $0x60] sm:$0xf]
      %v200 = vld [vmem:[%s166 + $0x64] sm:$0xf]
      %v201 = vld [vmem:[%s166 + $0x68] sm:$0xf]
      %v202 = vld [vmem:[%s166 + $0x6c] sm:$0xf]
      %v203 = vld [vmem:[%s166 + $0x70] sm:$0xf]
      %v204 = vld [vmem:[%s166 + $0x74] sm:$0xf]
      %v205 = vld [vmem:[%s166 + $0x78] sm:$0xf]
      %v206 = vld [vmem:[%s166 + $0x7c] sm:$0xf]
      %v207 = vld [vmem:[%s166 + $0x80] sm:$0xf]
      %v208 = vld [vmem:[%s166 + $0x84] sm:$0xf]
      %v209 = vld [vmem:[%s166 + $0x88] sm:$0xf]
      %v210 = vld [vmem:[%s166 + $0x8c] sm:$0xf]
      %v211 = vld [vmem:[%s166 + $0x90] sm:$0xf]
      %v212 = vld [vmem:[%s166 + $0x94] sm:$0xf]
      %v213 = vld [vmem:[%s166 + $0x98] sm:$0xf]
      %v214 = vld [vmem:[%s166 + $0x9c] sm:$0xf]
      %v215 = vld [vmem:[%s166 + $0xa0] sm:$0xf]
      %v216 = vld [vmem:[%s166 + $0xa4] sm:$0xf]
      %v217 = vld [vmem:[%s166 + $0xa8] sm:$0xf]
      %v218 = vld [vmem:[%s166 + $0xac] sm:$0xf]
      %v219 = vld [vmem:[%s166 + $0xb0] sm:$0xf]
      %v220 = vld [vmem:[%s166 + $0xb4] sm:$0xf]
      %v221 = vld [vmem:[%s166 + $0xb8] sm:$0xf]
      %v222 = vld [vmem:[%s166 + $0xbc] sm:$0xf]
      %v223 = vld [vmem:[%s166 + $0xc0] sm:$0xf]
      %v224 = vld [vmem:[%s166 + $0xc4] sm:$0xf]
      %v225 = vld [vmem:[%s166 + $0xc8] sm:$0xf]
      %v226 = vld [vmem:[%s166 + $0xcc] sm:$0xf]
      %v227 = vld [vmem:[%s166 + $0xd0] sm:$0xf]
      %v228 = vld [vmem:[%s166 + $0xd4] sm:$0xf]
      %v229 = vld [vmem:[%s166 + $0xd8] sm:$0xf]
      %v230 = vld [vmem:[%s166 + $0xdc] sm:$0xf]
      %v231 = vld [vmem:[%s166 + $0xe0] sm:$0xf]
      %v232 = vld [vmem:[%s166 + $0xe4] sm:$0xf]
      %v233 = vld [vmem:[%s166 + $0xe8] sm:$0xf]
      %v234 = vld [vmem:[%s166 + $0xec] sm:$0xf]
      %v235 = vld [vmem:[%s166 + $0xf0] sm:$0xf]
      %v236 = vld [vmem:[%s166 + $0xf4] sm:$0xf]
      %v237 = vld [vmem:[%s166 + $0xf8] sm:$0xf]
      %v238 = vld [vmem:[%s166 + $0xfc] sm:$0xf]
      %v239 = vld [vmem:[%s1] sm:$0xf]
      %v240 = vld [vmem:[%s1 + $0x4] sm:$0xf]
      %v241 = vld [vmem:[%s1 + $0x8] sm:$0xf]
      %v242 = vld [vmem:[%s1 + $0xc] sm:$0x3]
      %v243 = vld [vmem:[%s2] sm:$0x1]
      %v245 = vlaneseq
      %v246 = vshrl.u32 %v245, 7
      %v247 = vsub.s32 0, %v246
      %v248 = vrot.slane %v243, %v247
      %v314 = vunpack.c.l.b16 %v175
      %v315 = vunpack.c.l.b16 %v176
      %v316 = vunpack.c.l.b16 %v177
      %v317 = vunpack.c.l.b16 %v178
      %v318 = vunpack.c.l.b16 %v179
      %v319 = vunpack.c.l.b16 %v180
      %v320 = vunpack.c.l.b16 %v181
      %v321 = vunpack.c.l.b16 %v182
      %v322 = vunpack.c.l.b16 %v183
      %v323 = vunpack.c.l.b16 %v184
      %v324 = vunpack.c.l.b16 %v185
      %v325 = vunpack.c.l.b16 %v186
      %v326 = vunpack.c.l.b16 %v187
      %v327 = vunpack.c.l.b16 %v188
      %v328 = vunpack.c.l.b16 %v189
      %v329 = vunpack.c.l.b16 %v190
      %v330 = vunpack.c.l.b16 %v191
      %v331 = vunpack.c.l.b16 %v192
      %v332 = vunpack.c.l.b16 %v193
      %v333 = vunpack.c.l.b16 %v194
      %v334 = vunpack.c.l.b16 %v195
      %v335 = vunpack.c.l.b16 %v196
      %v336 = vunpack.c.l.b16 %v197
      %v337 = vunpack.c.l.b16 %v198
      %v338 = vunpack.c.l.b16 %v199
      %v339 = vunpack.c.l.b16 %v200
      %v340 = vunpack.c.l.b16 %v201
      %v341 = vunpack.c.l.b16 %v202
      %v342 = vunpack.c.l.b16 %v203
      %v343 = vunpack.c.l.b16 %v204
      %v344 = vunpack.c.l.b16 %v205
      %v345 = vunpack.c.l.b16 %v206
      %v346 = vunpack.c.l.b16 %v207
      %v347 = vunpack.c.l.b16 %v208
      %v348 = vunpack.c.l.b16 %v209
      %v349 = vunpack.c.l.b16 %v210
      %v350 = vunpack.c.l.b16 %v211
      %v351 = vunpack.c.l.b16 %v212
      %v352 = vunpack.c.l.b16 %v213
      %v353 = vunpack.c.l.b16 %v214
      %v354 = vunpack.c.l.b16 %v215
      %v355 = vunpack.c.l.b16 %v216
      %v356 = vunpack.c.l.b16 %v217
      %v357 = vunpack.c.l.b16 %v218
      %v358 = vunpack.c.l.b16 %v219
      %v359 = vunpack.c.l.b16 %v220
      %v360 = vunpack.c.l.b16 %v221
      %v361 = vunpack.c.l.b16 %v222
      %v362 = vunpack.c.l.b16 %v223
      %v363 = vunpack.c.l.b16 %v224
      %v364 = vunpack.c.l.b16 %v225
      %v365 = vunpack.c.l.b16 %v226
      %v366 = vunpack.c.l.b16 %v227
      %v367 = vunpack.c.l.b16 %v228
      %v368 = vunpack.c.l.b16 %v229
      %v369 = vunpack.c.l.b16 %v230
      %v370 = vunpack.c.l.b16 %v231
      %v371 = vunpack.c.l.b16 %v232
      %v372 = vunpack.c.l.b16 %v233
      %v373 = vunpack.c.l.b16 %v234
      %v374 = vunpack.c.l.b16 %v235
      %v375 = vunpack.c.l.b16 %v236
      %v376 = vunpack.c.l.b16 %v237
      %v377 = vunpack.c.l.b16 %v238
      %v378 = vpack.c.b16 %v315, %v314
      %v379 = vpack.c.b16 %v317, %v316
      %v380 = vpack.c.b16 %v319, %v318
      %v381 = vpack.c.b16 %v321, %v320
      %v382 = vpack.c.b16 %v323, %v322
      %v383 = vpack.c.b16 %v325, %v324
      %v384 = vpack.c.b16 %v327, %v326
      %v385 = vpack.c.b16 %v329, %v328
      %v386 = vpack.c.b16 %v331, %v330
      %v387 = vpack.c.b16 %v333, %v332
      %v388 = vpack.c.b16 %v335, %v334
      %v389 = vpack.c.b16 %v337, %v336
      %v390 = vpack.c.b16 %v339, %v338
      %v391 = vpack.c.b16 %v341, %v340
      %v392 = vpack.c.b16 %v343, %v342
      %v393 = vpack.c.b16 %v345, %v344
      %v394 = vpack.c.b16 %v347, %v346
      %v395 = vpack.c.b16 %v349, %v348
      %v396 = vpack.c.b16 %v351, %v350
      %v397 = vpack.c.b16 %v353, %v352
      %v398 = vpack.c.b16 %v355, %v354
      %v399 = vpack.c.b16 %v357, %v356
      %v400 = vpack.c.b16 %v359, %v358
      %v401 = vpack.c.b16 %v361, %v360
      %v402 = vpack.c.b16 %v363, %v362
      %v403 = vpack.c.b16 %v365, %v364
      %v404 = vpack.c.b16 %v367, %v366
      %v405 = vpack.c.b16 %v369, %v368
      %v406 = vpack.c.b16 %v371, %v370
      %v407 = vpack.c.b16 %v373, %v372
      %v408 = vpack.c.b16 %v375, %v374
      %v409 = vpack.c.b16 %v377, %v376
      %v414 = vunpack.c.l.b16 %v239
      %v415 = vunpack.c.l.b16 %v240
      %v416 = vunpack.c.l.b16 %v241
      %v417 = vunpack.c.l.b16 %v242
      %v418 = vpack.c.b16 %v415, %v414
      %v419 = vpack.c.b16 %v417, %v416
      %vm421 = vcmask 220160
      %v423 = vsel %vm421, %v378, 0
      %v426 = vsel %vm421, %v379, 0
      %v429 = vsel %vm421, %v380, 0
      %v432 = vsel %vm421, %v381, 0
      %v435 = vsel %vm421, %v382, 0
      %v438 = vsel %vm421, %v383, 0
      %v441 = vsel %vm421, %v384, 0
      %v444 = vsel %vm421, %v385, 0
      %v447 = vsel %vm421, %v386, 0
      %v450 = vsel %vm421, %v387, 0
      %v453 = vsel %vm421, %v388, 0
      %v456 = vsel %vm421, %v389, 0
      %v459 = vsel %vm421, %v390, 0
      %v462 = vsel %vm421, %v391, 0
      %v465 = vsel %vm421, %v392, 0
      %v468 = vsel %vm421, %v393, 0
      %v471 = vsel %vm421, %v394, 0
      %v474 = vsel %vm421, %v395, 0
      %v477 = vsel %vm421, %v396, 0
      %v480 = vsel %vm421, %v397, 0
      %v483 = vsel %vm421, %v398, 0
      %v486 = vsel %vm421, %v399, 0
      %v489 = vsel %vm421, %v400, 0
      %v492 = vsel %vm421, %v401, 0
      %v495 = vsel %vm421, %v402, 0
      %v498 = vsel %vm421, %v403, 0
      %v501 = vsel %vm421, %v404, 0
      %v504 = vsel %vm421, %v405, 0
      %v507 = vsel %vm421, %v406, 0
      %v510 = vsel %vm421, %v407, 0
      %v513 = vsel %vm421, %v408, 0
      %v516 = vsel %vm421, %v409, 0
      %vm518 = vcmask 1044480
      %vm519 = vcmask 1045504
      %v520 = vsel %vm518, 4294967295, 65535
      %v521 = vsel %vm519, %v520, 0
      %v523 = vand.u32 %v419, %v521
      %525 = vmatprep.subr.bf16.mxu0 0
      %526 = vmatpush1.bf16.msra.mxu0 0
      %527 = vmatprep.subr.bf16.mxu0 0
      %528 = vmatpush1.bf16.msra.mxu0 0
      %529 = vmatprep.subr.bf16.mxu0 0
      %530 = vmatpush1.bf16.msra.mxu0 0
      %531 = vmatprep.subr.bf16.mxu0 0
      %532 = vmatpush1.bf16.msra.mxu0 0
      %533 = vmatprep.subr.bf16.mxu0 0
      %534 = vmatpush1.bf16.msra.mxu0 0
      %535 = vmatprep.subr.bf16.mxu0 0
      %536 = vmatpush1.bf16.msra.mxu0 0
      %537 = vmatprep.subr.bf16.mxu0 0
      %538 = vmatpush1.bf16.msra.mxu0 %v523
      %539 = vmatprep.subr.bf16.mxu0 0
      %540 = vmatpush1.bf16.msra.mxu0 %v418
      %541 = vmatprep.subr.bf16.mxu0 0
      %542 = vmatpush2.bf16.msra.mxu0 0
      %543 = vmatprep.subr.bf16.mxu0 0
      %544 = vmatpush2.bf16.msra.mxu0 0
      %545 = vmatprep.subr.bf16.mxu0 0
      %546 = vmatpush2.bf16.msra.mxu0 0
      %547 = vmatprep.subr.bf16.mxu0 0
      %548 = vmatpush2.bf16.msra.mxu0 0
      %549 = vmatprep.subr.bf16.mxu0 0
      %550 = vmatpush2.bf16.msra.mxu0 0
      %551 = vmatprep.subr.bf16.mxu0 0
      %552 = vmatpush2.bf16.msra.mxu0 0
      %553 = vmatprep.subr.bf16.mxu0 0
      %554 = vmatpush2.bf16.msra.mxu0 0
      %555 = vmatprep.subr.bf16.mxu0 0
      %556 = vmatpush2.bf16.msra.mxu0 0
      %557 = vmatprep.mubr.bf16.mxu0 0
      %558 = vmatmul.mubr.bf16.gmra.mxu0 %v423
      %v559 = vpop.f32.mrf.mxu0
      %v560 = vadd.f32 %v248, %v559
      %v561 = vpop.f32.mrf.mxu0
      %v562 = vpop.f32.mrf.mxu0
      %v563 = vadd.f32 %v248, %v562
      %v564 = vpop.f32.mrf.mxu0
      %565 = vmatprep.mubr.bf16.mxu0 0
      %566 = vmatmul.mubr.bf16.gmra.mxu0 %v426
      %v567 = vpop.f32.mrf.mxu0
      %v568 = vadd.f32 %v248, %v567
      %v569 = vpop.f32.mrf.mxu0
      %v570 = vpop.f32.mrf.mxu0
      %v571 = vadd.f32 %v248, %v570
      %v572 = vpop.f32.mrf.mxu0
      %573 = vmatprep.mubr.bf16.mxu0 0
      %574 = vmatmul.mubr.bf16.gmra.mxu0 %v429
      %v575 = vpop.f32.mrf.mxu0
      %v576 = vadd.f32 %v248, %v575
      %v577 = vpop.f32.mrf.mxu0
      %v578 = vpop.f32.mrf.mxu0
      %v579 = vadd.f32 %v248, %v578
      %v580 = vpop.f32.mrf.mxu0
      %581 = vmatprep.mubr.bf16.mxu0 0
      %582 = vmatmul.mubr.bf16.gmra.mxu0 %v432
      %v583 = vpop.f32.mrf.mxu0
      %v584 = vadd.f32 %v248, %v583
      %v585 = vpop.f32.mrf.mxu0
      %v586 = vpop.f32.mrf.mxu0
      %v587 = vadd.f32 %v248, %v586
      %v588 = vpop.f32.mrf.mxu0
      %589 = vmatprep.mubr.bf16.mxu0 0
      %590 = vmatmul.mubr.bf16.gmra.mxu0 %v435
      %v591 = vpop.f32.mrf.mxu0
      %v592 = vadd.f32 %v248, %v591
      %v593 = vpop.f32.mrf.mxu0
      %v594 = vpop.f32.mrf.mxu0
      %v595 = vadd.f32 %v248, %v594
      %v596 = vpop.f32.mrf.mxu0
      %597 = vmatprep.mubr.bf16.mxu0 0
      %598 = vmatmul.mubr.bf16.gmra.mxu0 %v438
      %v599 = vpop.f32.mrf.mxu0
      %v600 = vadd.f32 %v248, %v599
      %v601 = vpop.f32.mrf.mxu0
      %v602 = vpop.f32.mrf.mxu0
      %v603 = vadd.f32 %v248, %v602
      %v604 = vpop.f32.mrf.mxu0
      %605 = vmatprep.mubr.bf16.mxu0 0
      %606 = vmatmul.mubr.bf16.gmra.mxu0 %v441
      %v607 = vpop.f32.mrf.mxu0
      %v608 = vadd.f32 %v248, %v607
      %v609 = vpop.f32.mrf.mxu0
      %v610 = vpop.f32.mrf.mxu0
      %v611 = vadd.f32 %v248, %v610
      %v612 = vpop.f32.mrf.mxu0
      %613 = vmatprep.mubr.bf16.mxu0 0
      %614 = vmatmul.mubr.bf16.gmra.mxu0 %v444
      %v615 = vpop.f32.mrf.mxu0
      %v616 = vadd.f32 %v248, %v615
      %v617 = vpop.f32.mrf.mxu0
      %v618 = vpop.f32.mrf.mxu0
      %v619 = vadd.f32 %v248, %v618
      %v620 = vpop.f32.mrf.mxu0
      %621 = vmatprep.mubr.bf16.mxu0 0
      %622 = vmatmul.mubr.bf16.gmra.mxu0 %v447
      %v623 = vpop.f32.mrf.mxu0
      %v624 = vadd.f32 %v248, %v623
      %v625 = vpop.f32.mrf.mxu0
      %v626 = vpop.f32.mrf.mxu0
      %v627 = vadd.f32 %v248, %v626
      %v628 = vpop.f32.mrf.mxu0
      %629 = vmatprep.mubr.bf16.mxu0 0
      %630 = vmatmul.mubr.bf16.gmra.mxu0 %v450
      %v631 = vpop.f32.mrf.mxu0
      %v632 = vadd.f32 %v248, %v631
      %v633 = vpop.f32.mrf.mxu0
      %v634 = vpop.f32.mrf.mxu0
      %v635 = vadd.f32 %v248, %v634
      %v636 = vpop.f32.mrf.mxu0
      %637 = vmatprep.mubr.bf16.mxu0 0
      %638 = vmatmul.mubr.bf16.gmra.mxu0 %v453
      %v639 = vpop.f32.mrf.mxu0
      %v640 = vadd.f32 %v248, %v639
      %v641 = vpop.f32.mrf.mxu0
      %v642 = vpop.f32.mrf.mxu0
      %v643 = vadd.f32 %v248, %v642
      %v644 = vpop.f32.mrf.mxu0
      %645 = vmatprep.mubr.bf16.mxu0 0
      %646 = vmatmul.mubr.bf16.gmra.mxu0 %v456
      %v647 = vpop.f32.mrf.mxu0
      %v648 = vadd.f32 %v248, %v647
      %v649 = vpop.f32.mrf.mxu0
      %v650 = vpop.f32.mrf.mxu0
      %v651 = vadd.f32 %v248, %v650
      %v652 = vpop.f32.mrf.mxu0
      %653 = vmatprep.mubr.bf16.mxu0 0
      %654 = vmatmul.mubr.bf16.gmra.mxu0 %v459
      %v655 = vpop.f32.mrf.mxu0
      %v656 = vadd.f32 %v248, %v655
      %v657 = vpop.f32.mrf.mxu0
      %v658 = vpop.f32.mrf.mxu0
      %v659 = vadd.f32 %v248, %v658
      %v660 = vpop.f32.mrf.mxu0
      %661 = vmatprep.mubr.bf16.mxu0 0
      %662 = vmatmul.mubr.bf16.gmra.mxu0 %v462
      %v663 = vpop.f32.mrf.mxu0
      %v664 = vadd.f32 %v248, %v663
      %v665 = vpop.f32.mrf.mxu0
      %v666 = vpop.f32.mrf.mxu0
      %v667 = vadd.f32 %v248, %v666
      %v668 = vpop.f32.mrf.mxu0
      %669 = vmatprep.mubr.bf16.mxu0 0
      %670 = vmatmul.mubr.bf16.gmra.mxu0 %v465
      %v671 = vpop.f32.mrf.mxu0
      %v672 = vadd.f32 %v248, %v671
      %v673 = vpop.f32.mrf.mxu0
      %v674 = vpop.f32.mrf.mxu0
      %v675 = vadd.f32 %v248, %v674
      %v676 = vpop.f32.mrf.mxu0
      %677 = vmatprep.mubr.bf16.mxu0 0
      %678 = vmatmul.mubr.bf16.gmra.mxu0 %v468
      %v679 = vpop.f32.mrf.mxu0
      %v680 = vadd.f32 %v248, %v679
      %v681 = vpop.f32.mrf.mxu0
      %v682 = vpop.f32.mrf.mxu0
      %v683 = vadd.f32 %v248, %v682
      %v684 = vpop.f32.mrf.mxu0
      %685 = vmatprep.mubr.bf16.mxu0 0
      %686 = vmatmul.mubr.bf16.gmra.mxu0 %v471
      %v687 = vpop.f32.mrf.mxu0
      %v688 = vadd.f32 %v248, %v687
      %v689 = vpop.f32.mrf.mxu0
      %v690 = vpop.f32.mrf.mxu0
      %v691 = vadd.f32 %v248, %v690
      %v692 = vpop.f32.mrf.mxu0
      %693 = vmatprep.mubr.bf16.mxu0 0
      %694 = vmatmul.mubr.bf16.gmra.mxu0 %v474
      %v695 = vpop.f32.mrf.mxu0
      %v696 = vadd.f32 %v248, %v695
      %v697 = vpop.f32.mrf.mxu0
      %v698 = vpop.f32.mrf.mxu0
      %v699 = vadd.f32 %v248, %v698
      %v700 = vpop.f32.mrf.mxu0
      %701 = vmatprep.mubr.bf16.mxu0 0
      %702 = vmatmul.mubr.bf16.gmra.mxu0 %v477
      %v703 = vpop.f32.mrf.mxu0
      %v704 = vadd.f32 %v248, %v703
      %v705 = vpop.f32.mrf.mxu0
      %v706 = vpop.f32.mrf.mxu0
      %v707 = vadd.f32 %v248, %v706
      %v708 = vpop.f32.mrf.mxu0
      %709 = vmatprep.mubr.bf16.mxu0 0
      %710 = vmatmul.mubr.bf16.gmra.mxu0 %v480
      %v711 = vpop.f32.mrf.mxu0
      %v712 = vadd.f32 %v248, %v711
      %v713 = vpop.f32.mrf.mxu0
      %v714 = vpop.f32.mrf.mxu0
      %v715 = vadd.f32 %v248, %v714
      %v716 = vpop.f32.mrf.mxu0
      %717 = vmatprep.mubr.bf16.mxu0 0
      %718 = vmatmul.mubr.bf16.gmra.mxu0 %v483
      %v719 = vpop.f32.mrf.mxu0
      %v720 = vadd.f32 %v248, %v719
      %v721 = vpop.f32.mrf.mxu0
      %v722 = vpop.f32.mrf.mxu0
      %v723 = vadd.f32 %v248, %v722
      %v724 = vpop.f32.mrf.mxu0
      %725 = vmatprep.mubr.bf16.mxu0 0
      %726 = vmatmul.mubr.bf16.gmra.mxu0 %v486
      %v727 = vpop.f32.mrf.mxu0
      %v728 = vadd.f32 %v248, %v727
      %v729 = vpop.f32.mrf.mxu0
      %v730 = vpop.f32.mrf.mxu0
      %v731 = vadd.f32 %v248, %v730
      %v732 = vpop.f32.mrf.mxu0
      %733 = vmatprep.mubr.bf16.mxu0 0
      %734 = vmatmul.mubr.bf16.gmra.mxu0 %v489
      %v735 = vpop.f32.mrf.mxu0
      %v736 = vadd.f32 %v248, %v735
      %v737 = vpop.f32.mrf.mxu0
      %v738 = vpop.f32.mrf.mxu0
      %v739 = vadd.f32 %v248, %v738
      %v740 = vpop.f32.mrf.mxu0
      %741 = vmatprep.mubr.bf16.mxu0 0
      %742 = vmatmul.mubr.bf16.gmra.mxu0 %v492
      %v743 = vpop.f32.mrf.mxu0
      %v744 = vadd.f32 %v248, %v743
      %v745 = vpop.f32.mrf.mxu0
      %v746 = vpop.f32.mrf.mxu0
      %v747 = vadd.f32 %v248, %v746
      %v748 = vpop.f32.mrf.mxu0
      %749 = vmatprep.mubr.bf16.mxu0 0
      %750 = vmatmul.mubr.bf16.gmra.mxu0 %v495
      %v751 = vpop.f32.mrf.mxu0
      %v752 = vadd.f32 %v248, %v751
      %v753 = vpop.f32.mrf.mxu0
      %v754 = vpop.f32.mrf.mxu0
      %v755 = vadd.f32 %v248, %v754
      %v756 = vpop.f32.mrf.mxu0
      %757 = vmatprep.mubr.bf16.mxu0 0
      %758 = vmatmul.mubr.bf16.gmra.mxu0 %v498
      %v759 = vpop.f32.mrf.mxu0
      %v760 = vadd.f32 %v248, %v759
      %v761 = vpop.f32.mrf.mxu0
      %v762 = vpop.f32.mrf.mxu0
      %v763 = vadd.f32 %v248, %v762
      %v764 = vpop.f32.mrf.mxu0
      %765 = vmatprep.mubr.bf16.mxu0 0
      %766 = vmatmul.mubr.bf16.gmra.mxu0 %v501
      %v767 = vpop.f32.mrf.mxu0
      %v768 = vadd.f32 %v248, %v767
      %v769 = vpop.f32.mrf.mxu0
      %v770 = vpop.f32.mrf.mxu0
      %v771 = vadd.f32 %v248, %v770
      %v772 = vpop.f32.mrf.mxu0
      %773 = vmatprep.mubr.bf16.mxu0 0
      %774 = vmatmul.mubr.bf16.gmra.mxu0 %v504
      %v775 = vpop.f32.mrf.mxu0
      %v776 = vadd.f32 %v248, %v775
      %v777 = vpop.f32.mrf.mxu0
      %v778 = vpop.f32.mrf.mxu0
      %v779 = vadd.f32 %v248, %v778
      %v780 = vpop.f32.mrf.mxu0
      %781 = vmatprep.mubr.bf16.mxu0 0
      %782 = vmatmul.mubr.bf16.gmra.mxu0 %v507
      %v783 = vpop.f32.mrf.mxu0
      %v784 = vadd.f32 %v248, %v783
      %v785 = vpop.f32.mrf.mxu0
      %v786 = vpop.f32.mrf.mxu0
      %v787 = vadd.f32 %v248, %v786
      %v788 = vpop.f32.mrf.mxu0
      %789 = vmatprep.mubr.bf16.mxu0 0
      %790 = vmatmul.mubr.bf16.gmra.mxu0 %v510
      %v791 = vpop.f32.mrf.mxu0
      %v792 = vadd.f32 %v248, %v791
      %v793 = vpop.f32.mrf.mxu0
      %v794 = vpop.f32.mrf.mxu0
      %v795 = vadd.f32 %v248, %v794
      %v796 = vpop.f32.mrf.mxu0
      %797 = vmatprep.mubr.bf16.mxu0 0
      %798 = vmatmul.mubr.bf16.gmra.mxu0 %v513
      %v799 = vpop.f32.mrf.mxu0
      %v800 = vadd.f32 %v248, %v799
      %v801 = vpop.f32.mrf.mxu0
      %v802 = vpop.f32.mrf.mxu0
      %v803 = vadd.f32 %v248, %v802
      %v804 = vpop.f32.mrf.mxu0
      %805 = vmatprep.mubr.bf16.mxu0 0
      %806 = vmatmul.mubr.bf16.gmra.mxu0 %v516
      %v807 = vpop.f32.mrf.mxu0
      %v808 = vadd.f32 %v248, %v807
      %v809 = vpop.f32.mrf.mxu0
      %v810 = vpop.f32.mrf.mxu0
      %v811 = vadd.f32 %v248, %v810
      %v812 = vpop.f32.mrf.mxu0
      %813 = vdwg.mxu0
      %v814 = vsub.f32 0.0, %v560
      %v815 = vsub.f32 0.0, %v563
      %v816 = vsub.f32 0.0, %v568
      %v817 = vsub.f32 0.0, %v571
      %v818 = vsub.f32 0.0, %v576
      %v819 = vsub.f32 0.0, %v579
      %v820 = vsub.f32 0.0, %v584
      %v821 = vsub.f32 0.0, %v587
      %v822 = vsub.f32 0.0, %v592
      %v823 = vsub.f32 0.0, %v595
      %v824 = vsub.f32 0.0, %v600
      %v825 = vsub.f32 0.0, %v603
      %v826 = vsub.f32 0.0, %v608
      %v827 = vsub.f32 0.0, %v611
      %v828 = vsub.f32 0.0, %v616
      %v829 = vsub.f32 0.0, %v619
      %v830 = vsub.f32 0.0, %v624
      %v831 = vsub.f32 0.0, %v627
      %v832 = vsub.f32 0.0, %v632
      %v833 = vsub.f32 0.0, %v635
      %v834 = vsub.f32 0.0, %v640
      %v835 = vsub.f32 0.0, %v643
      %v836 = vsub.f32 0.0, %v648
      %v837 = vsub.f32 0.0, %v651
      %v838 = vsub.f32 0.0, %v656
      %v839 = vsub.f32 0.0, %v659
      %v840 = vsub.f32 0.0, %v664
      %v841 = vsub.f32 0.0, %v667
      %v842 = vsub.f32 0.0, %v672
      %v843 = vsub.f32 0.0, %v675
      %v844 = vsub.f32 0.0, %v680
      %v845 = vsub.f32 0.0, %v683
      %v846 = vsub.f32 0.0, %v688
      %v847 = vsub.f32 0.0, %v691
      %v848 = vsub.f32 0.0, %v696
      %v849 = vsub.f32 0.0, %v699
      %v850 = vsub.f32 0.0, %v704
      %v851 = vsub.f32 0.0, %v707
      %v852 = vsub.f32 0.0, %v712
      %v853 = vsub.f32 0.0, %v715
      %v854 = vsub.f32 0.0, %v720
      %v855 = vsub.f32 0.0, %v723
      %v856 = vsub.f32 0.0, %v728
      %v857 = vsub.f32 0.0, %v731
      %v858 = vsub.f32 0.0, %v736
      %v859 = vsub.f32 0.0, %v739
      %v860 = vsub.f32 0.0, %v744
      %v861 = vsub.f32 0.0, %v747
      %v862 = vsub.f32 0.0, %v752
      %v863 = vsub.f32 0.0, %v755
      %v864 = vsub.f32 0.0, %v760
      %v865 = vsub.f32 0.0, %v763
      %v866 = vsub.f32 0.0, %v768
      %v867 = vsub.f32 0.0, %v771
      %v868 = vsub.f32 0.0, %v776
      %v869 = vsub.f32 0.0, %v779
      %v870 = vsub.f32 0.0, %v784
      %v871 = vsub.f32 0.0, %v787
      %v872 = vsub.f32 0.0, %v792
      %v873 = vsub.f32 0.0, %v795
      %v874 = vsub.f32 0.0, %v800
      %v875 = vsub.f32 0.0, %v803
      %v876 = vsub.f32 0.0, %v808
      %v877 = vsub.f32 0.0, %v811
      %v878 = vmul.f32 %v814, 1.442695
      %v879 = vpow.pop %v878
      %v880 = vmul.f32 %v815, 1.442695
      %v881 = vpow.pop %v880
      %v882 = vmul.f32 %v816, 1.442695
      %v883 = vpow.pop %v882
      %v884 = vmul.f32 %v817, 1.442695
      %v885 = vpow.pop %v884
      %v886 = vmul.f32 %v818, 1.442695
      %v887 = vpow.pop %v886
      %v888 = vmul.f32 %v819, 1.442695
      %v889 = vpow.pop %v888
      %v890 = vmul.f32 %v820, 1.442695
      %v891 = vpow.pop %v890
      %v892 = vmul.f32 %v821, 1.442695
      %v893 = vpow.pop %v892
      %v894 = vmul.f32 %v822, 1.442695
      %v895 = vpow.pop %v894
      %v896 = vmul.f32 %v823, 1.442695
      %v897 = vpow.pop %v896
      %v898 = vmul.f32 %v824, 1.442695
      %v899 = vpow.pop %v898
      %v900 = vmul.f32 %v825, 1.442695
      %v901 = vpow.pop %v900
      %v902 = vmul.f32 %v826, 1.442695
      %v903 = vpow.pop %v902
      %v904 = vmul.f32 %v827, 1.442695
      %v905 = vpow.pop %v904
      %v906 = vmul.f32 %v828, 1.442695
      %v907 = vpow.pop %v906
      %v908 = vmul.f32 %v829, 1.442695
      %v909 = vpow.pop %v908
      %v910 = vmul.f32 %v830, 1.442695
      %v911 = vpow.pop %v910
      %v912 = vmul.f32 %v831, 1.442695
      %v913 = vpow.pop %v912
      %v914 = vmul.f32 %v832, 1.442695
      %v915 = vpow.pop %v914
      %v916 = vmul.f32 %v833, 1.442695
      %v917 = vpow.pop %v916
      %v918 = vmul.f32 %v834, 1.442695
      %v919 = vpow.pop %v918
      %v920 = vmul.f32 %v835, 1.442695
      %v921 = vpow.pop %v920
      %v922 = vmul.f32 %v836, 1.442695
      %v923 = vpow.pop %v922
      %v924 = vmul.f32 %v837, 1.442695
      %v925 = vpow.pop %v924
      %v926 = vmul.f32 %v838, 1.442695
      %v927 = vpow.pop %v926
      %v928 = vmul.f32 %v839, 1.442695
      %v929 = vpow.pop %v928
      %v930 = vmul.f32 %v840, 1.442695
      %v931 = vpow.pop %v930
      %v932 = vmul.f32 %v841, 1.442695
      %v933 = vpow.pop %v932
      %v934 = vmul.f32 %v842, 1.442695
      %v935 = vpow.pop %v934
      %v936 = vmul.f32 %v843, 1.442695
      %v937 = vpow.pop %v936
      %v938 = vmul.f32 %v844, 1.442695
      %v939 = vpow.pop %v938
      %v940 = vmul.f32 %v845, 1.442695
      %v941 = vpow.pop %v940
      %v942 = vmul.f32 %v846, 1.442695
      %v943 = vpow.pop %v942
      %v944 = vmul.f32 %v847, 1.442695
      %v945 = vpow.pop %v944
      %v946 = vmul.f32 %v848, 1.442695
      %v947 = vpow.pop %v946
      %v948 = vmul.f32 %v849, 1.442695
      %v949 = vpow.pop %v948
      %v950 = vmul.f32 %v850, 1.442695
      %v951 = vpow.pop %v950
      %v952 = vmul.f32 %v851, 1.442695
      %v953 = vpow.pop %v952
      %v954 = vmul.f32 %v852, 1.442695
      %v955 = vpow.pop %v954
      %v956 = vmul.f32 %v853, 1.442695
      %v957 = vpow.pop %v956
      %v958 = vmul.f32 %v854, 1.442695
      %v959 = vpow.pop %v958
      %v960 = vmul.f32 %v855, 1.442695
      %v961 = vpow.pop %v960
      %v962 = vmul.f32 %v856, 1.442695
      %v963 = vpow.pop %v962
      %v964 = vmul.f32 %v857, 1.442695
      %v965 = vpow.pop %v964
      %v966 = vmul.f32 %v858, 1.442695
      %v967 = vpow.pop %v966
      %v968 = vmul.f32 %v859, 1.442695
      %v969 = vpow.pop %v968
      %v970 = vmul.f32 %v860, 1.442695
      %v971 = vpow.pop %v970
      %v972 = vmul.f32 %v861, 1.442695
      %v973 = vpow.pop %v972
      %v974 = vmul.f32 %v862, 1.442695
      %v975 = vpow.pop %v974
      %v976 = vmul.f32 %v863, 1.442695
      %v977 = vpow.pop %v976
      %v978 = vmul.f32 %v864, 1.442695
      %v979 = vpow.pop %v978
      %v980 = vmul.f32 %v865, 1.442695
      %v981 = vpow.pop %v980
      %v982 = vmul.f32 %v866, 1.442695
      %v983 = vpow.pop %v982
      %v984 = vmul.f32 %v867, 1.442695
      %v985 = vpow.pop %v984
      %v986 = vmul.f32 %v868, 1.442695
      %v987 = vpow.pop %v986
      %v988 = vmul.f32 %v869, 1.442695
      %v989 = vpow.pop %v988
      %v990 = vmul.f32 %v870, 1.442695
      %v991 = vpow.pop %v990
      %v992 = vmul.f32 %v871, 1.442695
      %v993 = vpow.pop %v992
      %v994 = vmul.f32 %v872, 1.442695
      %v995 = vpow.pop %v994
      %v996 = vmul.f32 %v873, 1.442695
      %v997 = vpow.pop %v996
      %v998 = vmul.f32 %v874, 1.442695
      %v999 = vpow.pop %v998
      %v1000 = vmul.f32 %v875, 1.442695
      %v1001 = vpow.pop %v1000
      %v1002 = vmul.f32 %v876, 1.442695
      %v1003 = vpow.pop %v1002
      %v1004 = vmul.f32 %v877, 1.442695
      %v1005 = vpow.pop %v1004
      %v1006 = vadd.f32 %v879, 1.0
      %v1007 = vadd.f32 %v881, 1.0
      %v1008 = vadd.f32 %v883, 1.0
      %v1009 = vadd.f32 %v885, 1.0
      %v1010 = vadd.f32 %v887, 1.0
      %v1011 = vadd.f32 %v889, 1.0
      %v1012 = vadd.f32 %v891, 1.0
      %v1013 = vadd.f32 %v893, 1.0
      %v1014 = vadd.f32 %v895, 1.0
      %v1015 = vadd.f32 %v897, 1.0
      %v1016 = vadd.f32 %v899, 1.0
      %v1017 = vadd.f32 %v901, 1.0
      %v1018 = vadd.f32 %v903, 1.0
      %v1019 = vadd.f32 %v905, 1.0
      %v1020 = vadd.f32 %v907, 1.0
      %v1021 = vadd.f32 %v909, 1.0
      %v1022 = vadd.f32 %v911, 1.0
      %v1023 = vadd.f32 %v913, 1.0
      %v1024 = vadd.f32 %v915, 1.0
      %v1025 = vadd.f32 %v917, 1.0
      %v1026 = vadd.f32 %v919, 1.0
      %v1027 = vadd.f32 %v921, 1.0
      %v1028 = vadd.f32 %v923, 1.0
      %v1029 = vadd.f32 %v925, 1.0
      %v1030 = vadd.f32 %v927, 1.0
      %v1031 = vadd.f32 %v929, 1.0
      %v1032 = vadd.f32 %v931, 1.0
      %v1033 = vadd.f32 %v933, 1.0
      %v1034 = vadd.f32 %v935, 1.0
      %v1035 = vadd.f32 %v937, 1.0
      %v1036 = vadd.f32 %v939, 1.0
      %v1037 = vadd.f32 %v941, 1.0
      %v1038 = vadd.f32 %v943, 1.0
      %v1039 = vadd.f32 %v945, 1.0
      %v1040 = vadd.f32 %v947, 1.0
      %v1041 = vadd.f32 %v949, 1.0
      %v1042 = vadd.f32 %v951, 1.0
      %v1043 = vadd.f32 %v953, 1.0
      %v1044 = vadd.f32 %v955, 1.0
      %v1045 = vadd.f32 %v957, 1.0
      %v1046 = vadd.f32 %v959, 1.0
      %v1047 = vadd.f32 %v961, 1.0
      %v1048 = vadd.f32 %v963, 1.0
      %v1049 = vadd.f32 %v965, 1.0
      %v1050 = vadd.f32 %v967, 1.0
      %v1051 = vadd.f32 %v969, 1.0
      %v1052 = vadd.f32 %v971, 1.0
      %v1053 = vadd.f32 %v973, 1.0
      %v1054 = vadd.f32 %v975, 1.0
      %v1055 = vadd.f32 %v977, 1.0
      %v1056 = vadd.f32 %v979, 1.0
      %v1057 = vadd.f32 %v981, 1.0
      %v1058 = vadd.f32 %v983, 1.0
      %v1059 = vadd.f32 %v985, 1.0
      %v1060 = vadd.f32 %v987, 1.0
      %v1061 = vadd.f32 %v989, 1.0
      %v1062 = vadd.f32 %v991, 1.0
      %v1063 = vadd.f32 %v993, 1.0
      %v1064 = vadd.f32 %v995, 1.0
      %v1065 = vadd.f32 %v997, 1.0
      %v1066 = vadd.f32 %v999, 1.0
      %v1067 = vadd.f32 %v1001, 1.0
      %v1068 = vadd.f32 %v1003, 1.0
      %v1069 = vadd.f32 %v1005, 1.0
      %v1070 = vrcp.pop %v1006
      %v1071 = vrcp.pop %v1007
      %v1072 = vrcp.pop %v1008
      %v1073 = vrcp.pop %v1009
      %v1074 = vrcp.pop %v1010
      %v1075 = vrcp.pop %v1011
      %v1076 = vrcp.pop %v1012
      %v1077 = vrcp.pop %v1013
      %v1078 = vrcp.pop %v1014
      %v1079 = vrcp.pop %v1015
      %v1080 = vrcp.pop %v1016
      %v1081 = vrcp.pop %v1017
      %v1082 = vrcp.pop %v1018
      %v1083 = vrcp.pop %v1019
      %v1084 = vrcp.pop %v1020
      %v1085 = vrcp.pop %v1021
      %v1086 = vrcp.pop %v1022
      %v1087 = vrcp.pop %v1023
      %v1088 = vrcp.pop %v1024
      %v1089 = vrcp.pop %v1025
      %v1090 = vrcp.pop %v1026
      %v1091 = vrcp.pop %v1027
      %v1092 = vrcp.pop %v1028
      %v1093 = vrcp.pop %v1029
      %v1094 = vrcp.pop %v1030
      %v1095 = vrcp.pop %v1031
      %v1096 = vrcp.pop %v1032
      %v1097 = vrcp.pop %v1033
      %v1098 = vrcp.pop %v1034
      %v1099 = vrcp.pop %v1035
      %v1100 = vrcp.pop %v1036
      %v1101 = vrcp.pop %v1037
      %v1102 = vrcp.pop %v1038
      %v1103 = vrcp.pop %v1039
      %v1104 = vrcp.pop %v1040
      %v1105 = vrcp.pop %v1041
      %v1106 = vrcp.pop %v1042
      %v1107 = vrcp.pop %v1043
      %v1108 = vrcp.pop %v1044
      %v1109 = vrcp.pop %v1045
      %v1110 = vrcp.pop %v1046
      %v1111 = vrcp.pop %v1047
      %v1112 = vrcp.pop %v1048
      %v1113 = vrcp.pop %v1049
      %v1114 = vrcp.pop %v1050
      %v1115 = vrcp.pop %v1051
      %v1116 = vrcp.pop %v1052
      %v1117 = vrcp.pop %v1053
      %v1118 = vrcp.pop %v1054
      %v1119 = vrcp.pop %v1055
      %v1120 = vrcp.pop %v1056
      %v1121 = vrcp.pop %v1057
      %v1122 = vrcp.pop %v1058
      %v1123 = vrcp.pop %v1059
      %v1124 = vrcp.pop %v1060
      %v1125 = vrcp.pop %v1061
      %v1126 = vrcp.pop %v1062
      %v1127 = vrcp.pop %v1063
      %v1128 = vrcp.pop %v1064
      %v1129 = vrcp.pop %v1065
      %v1130 = vrcp.pop %v1066
      %v1131 = vrcp.pop %v1067
      %v1132 = vrcp.pop %v1068
      %v1133 = vrcp.pop %v1069
      %v1134 = vmul.f32 %v560, %v1070
      %v1135 = vmul.f32 %v563, %v1071
      %v1136 = vmul.f32 %v568, %v1072
      %v1137 = vmul.f32 %v571, %v1073
      %v1138 = vmul.f32 %v576, %v1074
      %v1139 = vmul.f32 %v579, %v1075
      %v1140 = vmul.f32 %v584, %v1076
      %v1141 = vmul.f32 %v587, %v1077
      %v1142 = vmul.f32 %v592, %v1078
      %v1143 = vmul.f32 %v595, %v1079
      %v1144 = vmul.f32 %v600, %v1080
      %v1145 = vmul.f32 %v603, %v1081
      %v1146 = vmul.f32 %v608, %v1082
      %v1147 = vmul.f32 %v611, %v1083
      %v1148 = vmul.f32 %v616, %v1084
      %v1149 = vmul.f32 %v619, %v1085
      %v1150 = vmul.f32 %v624, %v1086
      %v1151 = vmul.f32 %v627, %v1087
      %v1152 = vmul.f32 %v632, %v1088
      %v1153 = vmul.f32 %v635, %v1089
      %v1154 = vmul.f32 %v640, %v1090
      %v1155 = vmul.f32 %v643, %v1091
      %v1156 = vmul.f32 %v648, %v1092
      %v1157 = vmul.f32 %v651, %v1093
      %v1158 = vmul.f32 %v656, %v1094
      %v1159 = vmul.f32 %v659, %v1095
      %v1160 = vmul.f32 %v664, %v1096
      %v1161 = vmul.f32 %v667, %v1097
      %v1162 = vmul.f32 %v672, %v1098
      %v1163 = vmul.f32 %v675, %v1099
      %v1164 = vmul.f32 %v680, %v1100
      %v1165 = vmul.f32 %v683, %v1101
      %v1166 = vmul.f32 %v688, %v1102
      %v1167 = vmul.f32 %v691, %v1103
      %v1168 = vmul.f32 %v696, %v1104
      %v1169 = vmul.f32 %v699, %v1105
      %v1170 = vmul.f32 %v704, %v1106
      %v1171 = vmul.f32 %v707, %v1107
      %v1172 = vmul.f32 %v712, %v1108
      %v1173 = vmul.f32 %v715, %v1109
      %v1174 = vmul.f32 %v720, %v1110
      %v1175 = vmul.f32 %v723, %v1111
      %v1176 = vmul.f32 %v728, %v1112
      %v1177 = vmul.f32 %v731, %v1113
      %v1178 = vmul.f32 %v736, %v1114
      %v1179 = vmul.f32 %v739, %v1115
      %v1180 = vmul.f32 %v744, %v1116
      %v1181 = vmul.f32 %v747, %v1117
      %v1182 = vmul.f32 %v752, %v1118
      %v1183 = vmul.f32 %v755, %v1119
      %v1184 = vmul.f32 %v760, %v1120
      %v1185 = vmul.f32 %v763, %v1121
      %v1186 = vmul.f32 %v768, %v1122
      %v1187 = vmul.f32 %v771, %v1123
      %v1188 = vmul.f32 %v776, %v1124
      %v1189 = vmul.f32 %v779, %v1125
      %v1190 = vmul.f32 %v784, %v1126
      %v1191 = vmul.f32 %v787, %v1127
      %v1192 = vmul.f32 %v792, %v1128
      %v1193 = vmul.f32 %v795, %v1129
      %v1194 = vmul.f32 %v800, %v1130
      %v1195 = vmul.f32 %v803, %v1131
      %v1196 = vmul.f32 %v808, %v1132
      %v1197 = vmul.f32 %v811, %v1133
      %v1198 = vpack.c.bf16 %v1135, %v1134
      %v1199 = vpack.c.bf16 %v1137, %v1136
      %v1200 = vpack.c.bf16 %v1139, %v1138
      %v1201 = vpack.c.bf16 %v1141, %v1140
      %v1202 = vpack.c.bf16 %v1143, %v1142
      %v1203 = vpack.c.bf16 %v1145, %v1144
      %v1204 = vpack.c.bf16 %v1147, %v1146
      %v1205 = vpack.c.bf16 %v1149, %v1148
      %v1206 = vpack.c.bf16 %v1151, %v1150
      %v1207 = vpack.c.bf16 %v1153, %v1152
      %v1208 = vpack.c.bf16 %v1155, %v1154
      %v1209 = vpack.c.bf16 %v1157, %v1156
      %v1210 = vpack.c.bf16 %v1159, %v1158
      %v1211 = vpack.c.bf16 %v1161, %v1160
      %v1212 = vpack.c.bf16 %v1163, %v1162
      %v1213 = vpack.c.bf16 %v1165, %v1164
      %v1214 = vpack.c.bf16 %v1167, %v1166
      %v1215 = vpack.c.bf16 %v1169, %v1168
      %v1216 = vpack.c.bf16 %v1171, %v1170
      %v1217 = vpack.c.bf16 %v1173, %v1172
      %v1218 = vpack.c.bf16 %v1175, %v1174
      %v1219 = vpack.c.bf16 %v1177, %v1176
      %v1220 = vpack.c.bf16 %v1179, %v1178
      %v1221 = vpack.c.bf16 %v1181, %v1180
      %v1222 = vpack.c.bf16 %v1183, %v1182
      %v1223 = vpack.c.bf16 %v1185, %v1184
      %v1224 = vpack.c.bf16 %v1187, %v1186
      %v1225 = vpack.c.bf16 %v1189, %v1188
      %v1226 = vpack.c.bf16 %v1191, %v1190
      %v1227 = vpack.c.bf16 %v1193, %v1192
      %v1228 = vpack.c.bf16 %v1195, %v1194
      %v1229 = vpack.c.bf16 %v1197, %v1196
      %v1262 = vunpack.c.l.b16 %v1198
      %v1263 = vunpack.c.h.b16 %v1198
      %v1264 = vunpack.c.l.b16 %v1199
      %v1265 = vunpack.c.h.b16 %v1199
      %v1266 = vunpack.c.l.b16 %v1200
      %v1267 = vunpack.c.h.b16 %v1200
      %v1268 = vunpack.c.l.b16 %v1201
      %v1269 = vunpack.c.h.b16 %v1201
      %v1270 = vunpack.c.l.b16 %v1202
      %v1271 = vunpack.c.h.b16 %v1202
      %v1272 = vunpack.c.l.b16 %v1203
      %v1273 = vunpack.c.h.b16 %v1203
      %v1274 = vunpack.c.l.b16 %v1204
      %v1275 = vunpack.c.h.b16 %v1204
      %v1276 = vunpack.c.l.b16 %v1205
      %v1277 = vunpack.c.h.b16 %v1205
      %v1278 = vunpack.c.l.b16 %v1206
      %v1279 = vunpack.c.h.b16 %v1206
      %v1280 = vunpack.c.l.b16 %v1207
      %v1281 = vunpack.c.h.b16 %v1207
      %v1282 = vunpack.c.l.b16 %v1208
      %v1283 = vunpack.c.h.b16 %v1208
      %v1284 = vunpack.c.l.b16 %v1209
      %v1285 = vunpack.c.h.b16 %v1209
      %v1286 = vunpack.c.l.b16 %v1210
      %v1287 = vunpack.c.h.b16 %v1210
      %v1288 = vunpack.c.l.b16 %v1211
      %v1289 = vunpack.c.h.b16 %v1211
      %v1290 = vunpack.c.l.b16 %v1212
      %v1291 = vunpack.c.h.b16 %v1212
      %v1292 = vunpack.c.l.b16 %v1213
      %v1293 = vunpack.c.h.b16 %v1213
      %v1294 = vunpack.c.l.b16 %v1214
      %v1295 = vunpack.c.h.b16 %v1214
      %v1296 = vunpack.c.l.b16 %v1215
      %v1297 = vunpack.c.h.b16 %v1215
      %v1298 = vunpack.c.l.b16 %v1216
      %v1299 = vunpack.c.h.b16 %v1216
      %v1300 = vunpack.c.l.b16 %v1217
      %v1301 = vunpack.c.h.b16 %v1217
      %v1302 = vunpack.c.l.b16 %v1218
      %v1303 = vunpack.c.h.b16 %v1218
      %v1304 = vunpack.c.l.b16 %v1219
      %v1305 = vunpack.c.h.b16 %v1219
      %v1306 = vunpack.c.l.b16 %v1220
      %v1307 = vunpack.c.h.b16 %v1220
      %v1308 = vunpack.c.l.b16 %v1221
      %v1309 = vunpack.c.h.b16 %v1221
      %v1310 = vunpack.c.l.b16 %v1222
      %v1311 = vunpack.c.h.b16 %v1222
      %v1312 = vunpack.c.l.b16 %v1223
      %v1313 = vunpack.c.h.b16 %v1223
      %v1314 = vunpack.c.l.b16 %v1224
      %v1315 = vunpack.c.h.b16 %v1224
      %v1316 = vunpack.c.l.b16 %v1225
      %v1317 = vunpack.c.h.b16 %v1225
      %v1318 = vunpack.c.l.b16 %v1226
      %v1319 = vunpack.c.h.b16 %v1226
      %v1320 = vunpack.c.l.b16 %v1227
      %v1321 = vunpack.c.h.b16 %v1227
      %v1322 = vunpack.c.l.b16 %v1228
      %v1323 = vunpack.c.h.b16 %v1228
      %v1324 = vunpack.c.l.b16 %v1229
      %v1325 = vunpack.c.h.b16 %v1229
      %v1326 = vpack.c.b16 %v1262, %v1262
      %v1327 = vpack.c.b16 %v1263, %v1263
      %v1328 = vpack.c.b16 %v1264, %v1264
      %v1329 = vpack.c.b16 %v1265, %v1265
      %v1330 = vpack.c.b16 %v1266, %v1266
      %v1331 = vpack.c.b16 %v1267, %v1267
      %v1332 = vpack.c.b16 %v1268, %v1268
      %v1333 = vpack.c.b16 %v1269, %v1269
      %v1334 = vpack.c.b16 %v1270, %v1270
      %v1335 = vpack.c.b16 %v1271, %v1271
      %v1336 = vpack.c.b16 %v1272, %v1272
      %v1337 = vpack.c.b16 %v1273, %v1273
      %v1338 = vpack.c.b16 %v1274, %v1274
      %v1339 = vpack.c.b16 %v1275, %v1275
      %v1340 = vpack.c.b16 %v1276, %v1276
      %v1341 = vpack.c.b16 %v1277, %v1277
      %v1342 = vpack.c.b16 %v1278, %v1278
      %v1343 = vpack.c.b16 %v1279, %v1279
      %v1344 = vpack.c.b16 %v1280, %v1280
      %v1345 = vpack.c.b16 %v1281, %v1281
      %v1346 = vpack.c.b16 %v1282, %v1282
      %v1347 = vpack.c.b16 %v1283, %v1283
      %v1348 = vpack.c.b16 %v1284, %v1284
      %v1349 = vpack.c.b16 %v1285, %v1285
      %v1350 = vpack.c.b16 %v1286, %v1286
      %v1351 = vpack.c.b16 %v1287, %v1287
      %v1352 = vpack.c.b16 %v1288, %v1288
      %v1353 = vpack.c.b16 %v1289, %v1289
      %v1354 = vpack.c.b16 %v1290, %v1290
      %v1355 = vpack.c.b16 %v1291, %v1291
      %v1356 = vpack.c.b16 %v1292, %v1292
      %v1357 = vpack.c.b16 %v1293, %v1293
      %v1358 = vpack.c.b16 %v1294, %v1294
      %v1359 = vpack.c.b16 %v1295, %v1295
      %v1360 = vpack.c.b16 %v1296, %v1296
      %v1361 = vpack.c.b16 %v1297, %v1297
      %v1362 = vpack.c.b16 %v1298, %v1298
      %v1363 = vpack.c.b16 %v1299, %v1299
      %v1364 = vpack.c.b16 %v1300, %v1300
      %v1365 = vpack.c.b16 %v1301, %v1301
      %v1366 = vpack.c.b16 %v1302, %v1302
      %v1367 = vpack.c.b16 %v1303, %v1303
      %v1368 = vpack.c.b16 %v1304, %v1304
      %v1369 = vpack.c.b16 %v1305, %v1305
      %v1370 = vpack.c.b16 %v1306, %v1306
      %v1371 = vpack.c.b16 %v1307, %v1307
      %v1372 = vpack.c.b16 %v1308, %v1308
      %v1373 = vpack.c.b16 %v1309, %v1309
      %v1374 = vpack.c.b16 %v1310, %v1310
      %v1375 = vpack.c.b16 %v1311, %v1311
      %v1376 = vpack.c.b16 %v1312, %v1312
      %v1377 = vpack.c.b16 %v1313, %v1313
      %v1378 = vpack.c.b16 %v1314, %v1314
      %v1379 = vpack.c.b16 %v1315, %v1315
      %v1380 = vpack.c.b16 %v1316, %v1316
      %v1381 = vpack.c.b16 %v1317, %v1317
      %v1382 = vpack.c.b16 %v1318, %v1318
      %v1383 = vpack.c.b16 %v1319, %v1319
      %v1384 = vpack.c.b16 %v1320, %v1320
      %v1385 = vpack.c.b16 %v1321, %v1321
      %v1386 = vpack.c.b16 %v1322, %v1322
      %v1387 = vpack.c.b16 %v1323, %v1323
      %v1388 = vpack.c.b16 %v1324, %v1324
      %v1389 = vpack.c.b16 %v1325, %v1325
      %vm1454 = vcmask 27648
      %1455 = vst.msk [vmem:[%s172] sm:$0xf] %vm1454, %v1326
      %1456 = vst.msk [vmem:[%s172 + $0x4] sm:$0xf] %vm1454, %v1327
      %1457 = vst.msk [vmem:[%s172 + $0x8] sm:$0xf] %vm1454, %v1328
      %1458 = vst.msk [vmem:[%s172 + $0xc] sm:$0xf] %vm1454, %v1329
      %1459 = vst.msk [vmem:[%s172 + $0x10] sm:$0xf] %vm1454, %v1330
      %1460 = vst.msk [vmem:[%s172 + $0x14] sm:$0xf] %vm1454, %v1331
      %1461 = vst.msk [vmem:[%s172 + $0x18] sm:$0xf] %vm1454, %v1332
      %1462 = vst.msk [vmem:[%s172 + $0x1c] sm:$0xf] %vm1454, %v1333
      %1463 = vst.msk [vmem:[%s172 + $0x20] sm:$0xf] %vm1454, %v1334
      %1464 = vst.msk [vmem:[%s172 + $0x24] sm:$0xf] %vm1454, %v1335
      %1465 = vst.msk [vmem:[%s172 + $0x28] sm:$0xf] %vm1454, %v1336
      %1466 = vst.msk [vmem:[%s172 + $0x2c] sm:$0xf] %vm1454, %v1337
      %1467 = vst.msk [vmem:[%s172 + $0x30] sm:$0xf] %vm1454, %v1338
      %1468 = vst.msk [vmem:[%s172 + $0x34] sm:$0xf] %vm1454, %v1339
      %1469 = vst.msk [vmem:[%s172 + $0x38] sm:$0xf] %vm1454, %v1340
      %1470 = vst.msk [vmem:[%s172 + $0x3c] sm:$0xf] %vm1454, %v1341
      %1471 = vst.msk [vmem:[%s172 + $0x40] sm:$0xf] %vm1454, %v1342
      %1472 = vst.msk [vmem:[%s172 + $0x44] sm:$0xf] %vm1454, %v1343
      %1473 = vst.msk [vmem:[%s172 + $0x48] sm:$0xf] %vm1454, %v1344
      %1474 = vst.msk [vmem:[%s172 + $0x4c] sm:$0xf] %vm1454, %v1345
      %1475 = vst.msk [vmem:[%s172 + $0x50] sm:$0xf] %vm1454, %v1346
      %1476 = vst.msk [vmem:[%s172 + $0x54] sm:$0xf] %vm1454, %v1347
      %1477 = vst.msk [vmem:[%s172 + $0x58] sm:$0xf] %vm1454, %v1348
      %1478 = vst.msk [vmem:[%s172 + $0x5c] sm:$0xf] %vm1454, %v1349
      %1479 = vst.msk [vmem:[%s172 + $0x60] sm:$0xf] %vm1454, %v1350
      %1480 = vst.msk [vmem:[%s172 + $0x64] sm:$0xf] %vm1454, %v1351
      %1481 = vst.msk [vmem:[%s172 + $0x68] sm:$0xf] %vm1454, %v1352
      %1482 = vst.msk [vmem:[%s172 + $0x6c] sm:$0xf] %vm1454, %v1353
      %1483 = vst.msk [vmem:[%s172 + $0x70] sm:$0xf] %vm1454, %v1354
      %1484 = vst.msk [vmem:[%s172 + $0x74] sm:$0xf] %vm1454, %v1355
      %1485 = vst.msk [vmem:[%s172 + $0x78] sm:$0xf] %vm1454, %v1356
      %1486 = vst.msk [vmem:[%s172 + $0x7c] sm:$0xf] %vm1454, %v1357
      %1487 = vst.msk [vmem:[%s172 + $0x80] sm:$0xf] %vm1454, %v1358
      %1488 = vst.msk [vmem:[%s172 + $0x84] sm:$0xf] %vm1454, %v1359
      %1489 = vst.msk [vmem:[%s172 + $0x88] sm:$0xf] %vm1454, %v1360
      %1490 = vst.msk [vmem:[%s172 + $0x8c] sm:$0xf] %vm1454, %v1361
      %1491 = vst.msk [vmem:[%s172 + $0x90] sm:$0xf] %vm1454, %v1362
      %1492 = vst.msk [vmem:[%s172 + $0x94] sm:$0xf] %vm1454, %v1363
      %1493 = vst.msk [vmem:[%s172 + $0x98] sm:$0xf] %vm1454, %v1364
      %1494 = vst.msk [vmem:[%s172 + $0x9c] sm:$0xf] %vm1454, %v1365
      %1495 = vst.msk [vmem:[%s172 + $0xa0] sm:$0xf] %vm1454, %v1366
      %1496 = vst.msk [vmem:[%s172 + $0xa4] sm:$0xf] %vm1454, %v1367
      %1497 = vst.msk [vmem:[%s172 + $0xa8] sm:$0xf] %vm1454, %v1368
      %1498 = vst.msk [vmem:[%s172 + $0xac] sm:$0xf] %vm1454, %v1369
      %1499 = vst.msk [vmem:[%s172 + $0xb0] sm:$0xf] %vm1454, %v1370
      %1500 = vst.msk [vmem:[%s172 + $0xb4] sm:$0xf] %vm1454, %v1371
      %1501 = vst.msk [vmem:[%s172 + $0xb8] sm:$0xf] %vm1454, %v1372
      %1502 = vst.msk [vmem:[%s172 + $0xbc] sm:$0xf] %vm1454, %v1373
      %1503 = vst.msk [vmem:[%s172 + $0xc0] sm:$0xf] %vm1454, %v1374
      %1504 = vst.msk [vmem:[%s172 + $0xc4] sm:$0xf] %vm1454, %v1375
      %1505 = vst.msk [vmem:[%s172 + $0xc8] sm:$0xf] %vm1454, %v1376
      %1506 = vst.msk [vmem:[%s172 + $0xcc] sm:$0xf] %vm1454, %v1377
      %1507 = vst.msk [vmem:[%s172 + $0xd0] sm:$0xf] %vm1454, %v1378
      %1508 = vst.msk [vmem:[%s172 + $0xd4] sm:$0xf] %vm1454, %v1379
      %1509 = vst.msk [vmem:[%s172 + $0xd8] sm:$0xf] %vm1454, %v1380
      %1510 = vst.msk [vmem:[%s172 + $0xdc] sm:$0xf] %vm1454, %v1381
      %1511 = vst.msk [vmem:[%s172 + $0xe0] sm:$0xf] %vm1454, %v1382
      %1512 = vst.msk [vmem:[%s172 + $0xe4] sm:$0xf] %vm1454, %v1383
      %1513 = vst.msk [vmem:[%s172 + $0xe8] sm:$0xf] %vm1454, %v1384
      %1514 = vst.msk [vmem:[%s172 + $0xec] sm:$0xf] %vm1454, %v1385
      %1515 = vst.msk [vmem:[%s172 + $0xf0] sm:$0xf] %vm1454, %v1386
      %1516 = vst.msk [vmem:[%s172 + $0xf4] sm:$0xf] %vm1454, %v1387
      %1517 = vst.msk [vmem:[%s172 + $0xf8] sm:$0xf] %vm1454, %v1388
      %1518 = vst.msk [vmem:[%s172 + $0xfc] sm:$0xf] %vm1454, %v1389
      %s1519 = smul.u32 64, %s14
      %p1520 = scmp.lt.s32.totalorder %s1519, 255
      %s1521 = scalar_select %p1520, %s1519, 255
      %s1522 = smul.addr %s1521, 4
      %s1523 = scalar_lea.vmem %s3, %s1522
      // Predicated region
      $region33: #{matmul_bias_act.1} parent=31 // pred_check
        %p1524 = pneg %p100
      $region34: #{matmul_bias_act.1} parent=31 // pred_check_branch
        %1526 = sbr.rel (%p1524) target = $region36
      $region35: #{matmul_bias_act.1} parent=31 // pred_region
        %s1527 = smul.u32 64, %s14
      $region36: #{matmul_bias_act.1} parent=31 // pred_fallthru
        _
    $region32: #{matmul_bias_act.1} parent=5 // pred_fallthru
      _
    %p1528 = scmp.le.s32.totalorder 2, %s9
    // Predicated region
    $region37: #{matmul_bias_act.1} parent=5 // pred_check
      %p1529 = pneg %p1528
    $region38: #{matmul_bias_act.1} parent=5 // pred_check_branch
      %1531 = sbr.rel (%p1529) target = $region40
    $region39: #{matmul_bias_act.1} parent=5 // pred_region
      %s1532 = ssub.s32 %s9, 2
      // Predicated region
      $region41: #{matmul_bias_act.1} parent=39 // pred_check
        %p1533 = pneg %p106
      $region42: #{matmul_bias_act.1} parent=39 // pred_check_branch
        %1535 = sbr.rel (%p1533) target = $region44
      $region43: #{matmul_bias_act.1} parent=39 // pred_region
        %s1536 = smul.u32 64, %s15
        %p1537 = scmp.lt.s32.totalorder %s1536, 255
        %s1538 = scalar_select %p1537, %s1536, 255
        %s1539 = smul.addr %s1538, 4
        %s1540 = scalar_lea.vmem %s3, %s1539
      $region44: #{matmul_bias_act.1} parent=39 // pred_fallthru
        _
    $region40: #{matmul_bias_act.1} parent=5 // pred_fallthru
      _
  $region6: #{matmul_bias_act.1} parent=0 // loop_footer
    %s13 = sadd.s32 1, %s9
  $region7: #{matmul_bias_act.1} parent=0 // loop_footer_branch
    %8 = sbr.rel target = $region3
  $region8: #{matmul_bias_act.1} parent=0 // loop_exit
    _

</llo_original>
